<compile_context>
chip_gen: v5e
topology: v5e:2x2
jax: 0.10.0
libtpu: 0.0.40
codegen_flags: <defaults>
</compile_context>

<pallas_src>
import functools
import math

import jax
import jax.numpy as jnp
from jax.experimental import pallas as pl
from jax.experimental.pallas import tpu as pltpu


_VMEM_LIMIT = 48 * 1024 * 1024   # safe on v5e/v6e (128 MiB) and v7x (64 MiB)


# ----------------------------------------------------------------------------
# helpers
# ----------------------------------------------------------------------------

def _tile(dim, target, align):
    """Largest tile <= target that divides dim and is a multiple of `align`
    (falls back to the full dim, which is always a legal block)."""
    if dim <= target:
        return dim
    t = (target // align) * align
    while t >= align:
        if dim % t == 0:
            return t
        t -= align
    return dim


def _erf_approx(x):
    # Abramowitz & Stegun 7.1.26; |error| <= 1.5e-7 (f32-level accuracy).
    a1, a2, a3, a4, a5 = (0.254829592, -0.284496736, 1.421413741,
                          -1.453152027, 1.061405429)
    p = 0.3275911
    s = jnp.where(x >= 0.0, 1.0, -1.0)
    z = jnp.abs(x)
    t = 1.0 / (1.0 + p * z)
    poly = ((((a5 * t + a4) * t + a3) * t + a2) * t + a1) * t
    return s * (1.0 - poly * jnp.exp(-z * z))


def _gelu_exact(x):
    # nn.GELU() default (erf-based), computed in f32.
    return 0.5 * x * (1.0 + _erf_approx(x * (1.0 / math.sqrt(2.0))))


# ----------------------------------------------------------------------------
# Tiled matmul with optional fused GELU and/or fused residual-add epilogue
# ----------------------------------------------------------------------------

def _matmul_kernel(*refs, activation, has_residual):
    if has_residual:
        a_ref, b_ref, r_ref, o_ref, acc_ref = refs
    else:
        a_ref, b_ref, o_ref, acc_ref = refs
        r_ref = None

    @pl.when(pl.program_id(2) == 0)
    def _():
        acc_ref[...] = jnp.zeros_like(acc_ref)

    acc_ref[...] += jnp.dot(a_ref[...], b_ref[...],
                            preferred_element_type=jnp.float32)

    @pl.when(pl.program_id(2) == pl.num_programs(2) - 1)
    def _():
        r = acc_ref[...]
        if activation == "gelu":
            r = _gelu_exact(r)
        if r_ref is not None:
            r = r + r_ref[...].astype(jnp.float32)
        o_ref[...] = r.astype(o_ref.dtype)


def pallas_matmul(a, b, *, residual=None, activation=None,
                  out_dtype=jnp.float32):
    """a: (M, K), b: (K, N) -> (M, N). bf16 MXU inputs, f32 accumulation.
    If `residual` (M, N) is given, it is added in the epilogue (read once per
    output tile)."""
    M, K = a.shape
    K2, N = b.shape
    assert K == K2
    a = a.astype(jnp.bfloat16)
    b = b.astype(jnp.bfloat16)
    tm = _tile(M, 512, 8)
    tn = _tile(N, 512, 128)
    tk = _tile(K, 1024, 128)
    has_residual = residual is not None

    in_specs = [pl.BlockSpec((tm, tk), lambda i, j, k: (i, k)),
                pl.BlockSpec((tk, tn), lambda i, j, k: (k, j))]
    operands = [a, b]
    if has_residual:
        in_specs.append(pl.BlockSpec((tm, tn), lambda i, j, k: (i, j)))
        operands.append(residual)

    flops = 2 * M * N * K
    bytes_accessed = (2 * (M * K + K * N)
                      + M * N * jnp.dtype(out_dtype).itemsize
                      + (M * N * 4 if has_residual else 0))
    return pl.pallas_call(
        functools.partial(_matmul_kernel, activation=activation,
                          has_residual=has_residual),
        out_shape=jax.ShapeDtypeStruct((M, N), out_dtype),
        grid=(M // tm, N // tn, K // tk),
        in_specs=in_specs,
        out_specs=pl.BlockSpec((tm, tn), lambda i, j, k: (i, j)),
        scratch_shapes=[pltpu.VMEM((tm, tn), jnp.float32)],
        compiler_params=pltpu.CompilerParams(
            dimension_semantics=("parallel", "parallel", "arbitrary"),
            vmem_limit_bytes=_VMEM_LIMIT),
        cost_estimate=pl.CostEstimate(
            flops=int(flops),
            transcendentals=int(M * N if activation == "gelu" else 0),
            bytes_accessed=int(bytes_accessed)),
    )(*operands)


# ----------------------------------------------------------------------------
# Flash-style causal attention, triangular grid (only valid (qi, ki) pairs)
# ----------------------------------------------------------------------------

def _flash_attn_kernel(qi_ref, ki_ref, q_ref, k_ref, v_ref, o_ref,
                       m_sc, l_sc, acc_sc, *, scale, t):
    step = pl.program_id(2)
    qi = qi_ref[step]
    ki = ki_ref[step]

    @pl.when(ki == 0)
    def _():
        m_sc[...] = jnp.full_like(m_sc, -1e30)
        l_sc[...] = jnp.zeros_like(l_sc)
        acc_sc[...] = jnp.zeros_like(acc_sc)

    q = q_ref[0, 0]                         # (t, Dh) bf16
    k = k_ref[0, 0]                         # (t, Dh) bf16
    v = v_ref[0, 0]                         # (t, Dh) bf16
    s = jax.lax.dot_general(q, k, (((1,), (1,)), ((), ())),
                            preferred_element_type=jnp.float32) * scale
    row = qi * t + jax.lax.broadcasted_iota(jnp.int32, (t, t), 0)
    col = ki * t + jax.lax.broadcasted_iota(jnp.int32, (t, t), 1)
    s = jnp.where(col <= row, s, -1e30)     # finite mask value (no NaNs)

    m_prev = m_sc[...]
    m_new = jnp.maximum(m_prev, jnp.max(s, axis=-1, keepdims=True))
    alpha = jnp.exp(m_prev - m_new)
    p = jnp.exp(s - m_new)
    l_sc[...] = alpha * l_sc[...] + jnp.sum(p, axis=-1, keepdims=True)
    acc_sc[...] = alpha * acc_sc[...] + jax.lax.dot_general(
        p.astype(v.dtype), v, (((1,), (0,)), ((), ())),
        preferred_element_type=jnp.float32)
    m_sc[...] = m_new

    # Last contributing kv tile for this q tile (causal, tq == tk).
    @pl.when(ki == qi)
    def _():
        inv = pl.reciprocal(l_sc[...], approx=True)
        o_ref[0, 0] = (acc_sc[...] * inv).astype(o_ref.dtype)


def pallas_flash_attention(q, k, v, *, scale):
    """q, k, v: (B, H, S, Dh) -> (B, H, S, Dh) bf16, causal."""
    B, H, S, Dh = q.shape
    t = _tile(S, 512, 8)                   # tq == tk by construction
    assert S % t == 0
    nq = S // t
    n_steps = nq * (nq + 1) // 2           # triangular enumeration only

    qi_list, ki_list = [], []
    for qi in range(nq):
        for ki in range(qi + 1):
            qi_list.append(qi)
            ki_list.append(ki)
    qi_tbl = jnp.asarray(qi_list, dtype=jnp.int32)
    ki_tbl = jnp.asarray(ki_list, dtype=jnp.int32)

    q_spec = pl.BlockSpec((1, 1, t, Dh),
                          lambda b, h, s, qi_t, ki_t: (b, h, qi_t[s], 0))
    k_spec = pl.BlockSpec((1, 1, t, Dh),
                          lambda b, h, s, qi_t, ki_t: (b, h, ki_t[s], 0))
    v_spec = pl.BlockSpec((1, 1, t, Dh),
                          lambda b, h, s, qi_t, ki_t: (b, h, ki_t[s], 0))
    o_spec = pl.BlockSpec((1, 1, t, Dh),
                          lambda b, h, s, qi_t, ki_t: (b, h, qi_t[s], 0))

    flops = 4 * B * H * S * S * Dh // 2
    return pl.pallas_call(
        functools.partial(_flash_attn_kernel, scale=scale, t=t),
        out_shape=jax.ShapeDtypeStruct((B, H, S, Dh), jnp.bfloat16),
        grid_spec=pltpu.PrefetchScalarGridSpec(
            num_scalar_prefetch=2,
            grid=(B, H, n_steps),
            in_specs=[q_spec, k_spec, v_spec],
            out_specs=o_spec,
            scratch_shapes=[pltpu.VMEM((t, 1), jnp.float32),
                            pltpu.VMEM((t, 1), jnp.float32),
                            pltpu.VMEM((t, Dh), jnp.float32)]),
        compiler_params=pltpu.CompilerParams(
            dimension_semantics=("parallel", "parallel", "arbitrary")),
        cost_estimate=pl.CostEstimate(
            flops=int(flops),
            transcendentals=int(B * H * S * S // 2),
            bytes_accessed=int(2 * 4 * B * H * S * Dh)),
    )(qi_tbl, ki_tbl, q.astype(jnp.bfloat16), k.astype(jnp.bfloat16),
      v.astype(jnp.bfloat16))


# ----------------------------------------------------------------------------
# LayerNorm (row-tiled, bias=False, eps=1e-5)
# ----------------------------------------------------------------------------

def _layernorm_kernel(x_ref, w_ref, o_ref):
    x = x_ref[...].astype(jnp.float32)
    mu = jnp.mean(x, axis=-1, keepdims=True)
    var = jnp.mean(jnp.square(x - mu), axis=-1, keepdims=True)
    o_ref[...] = ((x - mu) * jax.lax.rsqrt(var + 1e-5)
                  * w_ref[...]).astype(o_ref.dtype)


def pallas_layernorm(x2d, weight, out_dtype=jnp.bfloat16):
    R, D = x2d.shape
    tr = _tile(R, 512, 8)
    return pl.pallas_call(
        _layernorm_kernel,
        out_shape=jax.ShapeDtypeStruct((R, D), out_dtype),
        grid=(R // tr,),
        in_specs=[pl.BlockSpec((tr, D), lambda i: (i, 0)),
                  pl.BlockSpec((1, D), lambda i: (0, 0))],
        out_specs=pl.BlockSpec((tr, D), lambda i: (i, 0)),
        compiler_params=pltpu.CompilerParams(
            dimension_semantics=("parallel",)),
    )(x2d, weight.reshape(1, -1))


# ----------------------------------------------------------------------------
# Fused lm_head matmul + causal-LM cross-entropy (online logsumexp over vocab,
# vocab padded to a multiple of 128; padded columns masked out)
# ----------------------------------------------------------------------------

def _lmhead_ce_kernel(x_ref, w_ref, lbl_ref, logits_ref, loss_ref,
                      m_sc, l_sc, t_sc, *, tv, v_real):
    v = pl.program_id(1)

    @pl.when(v == 0)
    def _():
        m_sc[...] = jnp.full_like(m_sc, -1e30)
        l_sc[...] = jnp.zeros_like(l_sc)
        t_sc[...] = jnp.zeros_like(t_sc)

    logits = jnp.dot(x_ref[...], w_ref[...], preferred_element_type=jnp.float32)
    logits_ref[...] = logits.astype(logits_ref.dtype)

    col = v * tv + jax.lax.broadcasted_iota(jnp.int32, logits.shape, 1)
    valid = col < v_real
    masked = jnp.where(valid, logits, -1e30)

    m_prev = m_sc[...]
    m_new = jnp.maximum(m_prev, jnp.max(masked, axis=-1, keepdims=True))
    p = jnp.where(valid, jnp.exp(logits - m_new), 0.0)
    l_sc[...] = l_sc[...] * jnp.exp(m_prev - m_new) + jnp.sum(
        p, axis=-1, keepdims=True)
    m_sc[...] = m_new

    t_sc[...] += jnp.sum(jnp.where(col == lbl_ref[...], logits, 0.0),
                         axis=-1, keepdims=True)

    @pl.when(v == pl.num_programs(1) - 1)
    def _():
        loss_ref[...] = m_sc[...] + jnp.log(l_sc[...]) - t_sc[...]


def pallas_lm_head_cross_entropy(x2d, w_lm, labels):
    """x2d: (N, D), w_lm: (D, V), labels: (N,) -> (logits (N, V) f32, mean CE)."""
    N, D = x2d.shape
    D2, V = w_lm.shape
    assert D == D2
    Vp = ((V + 127) // 128) * 128          # pad vocab to lane multiple
    w = w_lm.astype(jnp.bfloat16)
    if Vp != V:
        w = jnp.pad(w, ((0, 0), (0, Vp - V)))
    tr = _tile(N, 512, 8)
    tv = _tile(Vp, 2048, 128)
    logits, loss_rows = pl.pallas_call(
        functools.partial(_lmhead_ce_kernel, tv=tv, v_real=V),
        out_shape=(jax.ShapeDtypeStruct((N, Vp), jnp.float32),
                   jax.ShapeDtypeStruct((N, 1), jnp.float32)),
        grid=(N // tr, Vp // tv),
        in_specs=[pl.BlockSpec((tr, D), lambda r, v: (r, 0)),
                  pl.BlockSpec((D, tv), lambda r, v: (0, v)),
                  pl.BlockSpec((tr, 1), lambda r, v: (r, 0))],
        out_specs=(pl.BlockSpec((tr, tv), lambda r, v: (r, v)),
                   pl.BlockSpec((tr, 1), lambda r, v: (r, 0))),
        scratch_shapes=[pltpu.VMEM((tr, 1), jnp.float32),
                        pltpu.VMEM((tr, 1), jnp.float32),
                        pltpu.VMEM((tr, 1), jnp.float32)],
        compiler_params=pltpu.CompilerParams(
            dimension_semantics=("parallel", "arbitrary"),
            vmem_limit_bytes=_VMEM_LIMIT),
        cost_estimate=pl.CostEstimate(
            flops=int(2 * N * D * Vp),
            transcendentals=int(N * Vp),
            bytes_accessed=int(2 * (N * D + D * Vp) + 4 * N * Vp)),
    )(x2d.astype(jnp.bfloat16), w, labels.reshape(N, 1).astype(jnp.int32))
    loss = jnp.mean(loss_rows)             # tiny (N,) reduction in XLA glue
    return logits[:, :V], loss


# ----------------------------------------------------------------------------
# Model glue (gathers / reshapes / transposes only; heavy math in kernels)
# ----------------------------------------------------------------------------

def attention_block(h_normed, x_resid, blk, B, S, n_head):
    D = h_normed.shape[-1]
    Dh = D // n_head
    # Single lane-dense QKV matmul: (B*S, D) x (D, 3D) -> (B*S, 3D)
    qkv = pallas_matmul(h_normed, blk["w_qkv"], out_dtype=jnp.bfloat16)
    qkv = qkv.reshape(B, S, 3, n_head, Dh).transpose(2, 0, 3, 1, 4)  # (3,B,H,S,Dh)
    attn = pallas_flash_attention(qkv[0], qkv[1], qkv[2],
                                  scale=1.0 / math.sqrt(Dh))         # (B,H,S,Dh)
    a2d = attn.transpose(0, 2, 1, 3).reshape(B * S, D)               # lane-dense
    # out_proj with fused residual add
    return pallas_matmul(a2d, blk["w_o"], residual=x_resid,
                         out_dtype=jnp.float32)


def gpt_forward(idx, params, n_head, calc_loss=True):
    B, S = idx.shape
    V, D = params["wte"].shape

    tok_emb = params["wte"][idx]                        # XLA gather (glue)
    pos_emb = params["wpe"][:S]
    x = (tok_emb + pos_emb[None, :, :]).reshape(B * S, D).astype(jnp.float32)

    for blk in params["blocks"]:
        h1 = pallas_layernorm(x, blk["ln_1"])
        x = attention_block(h1, x, blk, B, S, n_head)   # residual fused
        h2 = pallas_layernorm(x, blk["ln_2"])
        hidden = pallas_matmul(h2, blk["c_fc"], activation="gelu",
                               out_dtype=jnp.bfloat16)
        x = pallas_matmul(hidden, blk["c_proj"], residual=x,
                          out_dtype=jnp.float32)        # residual fused

    xf = pallas_layernorm(x, params["ln_f"])
    # Drop the last position BEFORE the lm_head matmul.
    xf = xf.reshape(B, S, D)[:, :-1, :].reshape(B * (S - 1), D)

    if calc_loss:
        labels = idx[:, 1:].reshape(-1)
        logits2d, loss = pallas_lm_head_cross_entropy(
            xf, params["lm_head"], labels)
    else:
        Vp = ((V + 127) // 128) * 128
        w = params["lm_head"].astype(jnp.bfloat16)
        if Vp != V:
            w = jnp.pad(w, ((0, 0), (0, Vp - V)))
        logits2d = pallas_matmul(xf, w, out_dtype=jnp.float32)[:, :V]
        loss = None
    logits = logits2d.reshape(B, S - 1, V)
    return logits, loss


# ----------------------------------------------------------------------------
# Deterministic parameter init (weights stored bf16 for the MXU path)
# ----------------------------------------------------------------------------

def init_params(key, vocab_size, context_length, n_layer, n_head, n_embed):
    keys = jax.random.split(key, 3 + n_layer)

    def w(k, shape):
        return (0.02 * jax.random.normal(k, shape, jnp.float32)).astype(jnp.bfloat16)

    params = {
        "wte": 0.02 * jax.random.normal(keys[0], (vocab_size, n_embed), jnp.float32),
        "wpe": 0.02 * jax.random.normal(keys[1], (context_length, n_embed), jnp.float32),
        "ln_f": jnp.ones((n_embed,), jnp.float32),
        "lm_head": w(keys[2], (n_embed, vocab_size)),   # (D, V), bias=False
        "blocks": [],
    }
    for l in range(n_layer):
        bk = jax.random.split(keys[3 + l], 4)
        params["blocks"].append({
            "ln_1": jnp.ones((n_embed,), jnp.float32),
            "w_qkv": w(bk[0], (n_embed, 3 * n_embed)),  # fused [Wq | Wk | Wv]
            "w_o": w(bk[1], (n_embed, n_embed)),
            "ln_2": jnp.ones((n_embed,), jnp.float32),
            "c_fc": w(bk[2], (n_embed, 4 * n_embed)),
            "c_proj": w(bk[3], (4 * n_embed, n_embed)),
        })
    return params


# ----------------------------------------------------------------------------
# Main
# ----------------------------------------------------------------------------

if __name__ == "__main__":
    vocab_size = 64
    context_length = 16
    n_layer = 2
    n_head = 4
    n_embed = 32
    batch, seq = 2, 8

    key = jax.random.PRNGKey(0)
    key_params, key_idx = jax.random.split(key)
    params = init_params(key_params, vocab_size, context_length,
                         n_layer, n_head, n_embed)

    idx = jax.random.randint(key_idx, (batch, seq), 0, vocab_size,
                             dtype=jnp.int32)

    fwd = jax.jit(functools.partial(gpt_forward, n_head=n_head, calc_loss=True))
    logits, loss = fwd(idx, params)
    jax.block_until_ready((logits, loss))

    assert logits.shape == (batch, seq - 1, vocab_size)
    assert loss.shape == ()
    assert jnp.isfinite(loss)
    print("KERNEL_OK")
</pallas_src>

<mosaic_0001>
module attributes {stable_mosaic.version = 11 : i64} {
  func.func @_layernorm_kernel(%arg0: i32, %arg1: memref<16x32xf32, #tpu.memory_space<vmem>>, %arg2: memref<1x32xf32, #tpu.memory_space<vmem>>, %arg3: memref<16x32xbf16, #tpu.memory_space<vmem>>) attributes {dimension_semantics = [#tpu.dimension_semantics<parallel>], iteration_bounds = array<i64: 1>, scalar_prefetch = 0 : i64, scratch_operands = 0 : i64, tpu.core_type = #tpu.core_type<tc>, window_params = [{transform_indices = @transform_0, window_bounds = array<i64: 16, 32>}, {pipeline_mode = #tpu.pipeline_mode<synchronous>, transform_indices = @transform_1, window_bounds = array<i64: 1, 32>}, {transform_indices = @transform_2, window_bounds = array<i64: 16, 32>}]} {
    %c0 = arith.constant 0 : index
    %c0_0 = arith.constant 0 : index
    %0 = vector.load %arg1[%c0, %c0_0] : memref<16x32xf32, #tpu.memory_space<vmem>>, vector<16x32xf32>
    %cst = arith.constant dense<0.000000e+00> : vector<16xf32>
    %1 = vector.multi_reduction <add>, %0, %cst [1] : vector<16x32xf32> to vector<16xf32>
    %2 = vector.shape_cast %1 : vector<16xf32> to vector<16x1xf32>
    %cst_1 = arith.constant 3.200000e+01 : f32
    %3 = vector.broadcast %cst_1 : f32 to vector<16x1xf32>
    %4 = arith.divf %2, %3 : vector<16x1xf32>
    %5 = vector.broadcast %4 : vector<16x1xf32> to vector<16x32xf32>
    %6 = arith.subf %0, %5 : vector<16x32xf32>
    %7 = arith.mulf %6, %6 : vector<16x32xf32>
    %cst_2 = arith.constant dense<0.000000e+00> : vector<16xf32>
    %8 = vector.multi_reduction <add>, %7, %cst_2 [1] : vector<16x32xf32> to vector<16xf32>
    %9 = vector.shape_cast %8 : vector<16xf32> to vector<16x1xf32>
    %cst_3 = arith.constant 3.200000e+01 : f32
    %10 = vector.broadcast %cst_3 : f32 to vector<16x1xf32>
    %11 = arith.divf %9, %10 : vector<16x1xf32>
    %12 = vector.broadcast %4 : vector<16x1xf32> to vector<16x32xf32>
    %13 = arith.subf %0, %12 : vector<16x32xf32>
    %cst_4 = arith.constant 9.99999974E-6 : f32
    %14 = vector.broadcast %cst_4 : f32 to vector<16x1xf32>
    %15 = arith.addf %11, %14 : vector<16x1xf32>
    %16 = math.rsqrt %15 : vector<16x1xf32>
    %17 = vector.broadcast %16 : vector<16x1xf32> to vector<16x32xf32>
    %18 = arith.mulf %13, %17 : vector<16x32xf32>
    %c0_5 = arith.constant 0 : index
    %c0_6 = arith.constant 0 : index
    %19 = vector.load %arg2[%c0_5, %c0_6] : memref<1x32xf32, #tpu.memory_space<vmem>>, vector<1x32xf32>
    %20 = vector.broadcast %19 : vector<1x32xf32> to vector<16x32xf32>
    %21 = arith.mulf %18, %20 : vector<16x32xf32>
    %22 = arith.truncf %21 : vector<16x32xf32> to vector<16x32xbf16>
    %c0_7 = arith.constant 0 : index
    %c0_8 = arith.constant 0 : index
    %23 = vector.load %arg3[%c0_7, %c0_8] : memref<16x32xbf16, #tpu.memory_space<vmem>>, vector<16x32xbf16>
    tpu.vector_store %arg3[%c0_7, %c0_8], %22 {strides = array<i32>} : memref<16x32xbf16, #tpu.memory_space<vmem>>, vector<16x32xbf16>,
    return
  }
  func.func @transform_0(%arg0: i32) -> (i32, i32) {
    %c0_i32 = arith.constant 0 : i32
    %c0_i32_0 = arith.constant 0 : i32
    return %arg0, %c0_i32 : i32, i32
  }
  func.func @transform_1(%arg0: i32) -> (i32, i32) {
    %c0_i32 = arith.constant 0 : i32
    %c0_i32_0 = arith.constant 0 : i32
    %c0_i32_1 = arith.constant 0 : i32
    return %c0_i32, %c0_i32_0 : i32, i32
  }
  func.func @transform_2(%arg0: i32) -> (i32, i32) {
    %c0_i32 = arith.constant 0 : i32
    %c0_i32_0 = arith.constant 0 : i32
    return %arg0, %c0_i32 : i32, i32
  }
}

module attributes {stable_mosaic.version = 11 : i64} {
  func.func @_matmul_kernel(%arg0: i32, %arg1: i32, %arg2: i32, %arg3: memref<16x32xbf16, #tpu.memory_space<vmem>>, %arg4: memref<32x96xbf16, #tpu.memory_space<vmem>>, %arg5: memref<16x96xbf16, #tpu.memory_space<vmem>>, %arg6: memref<16x96xf32, #tpu.memory_space<vmem>>) attributes {dimension_semantics = [#tpu.dimension_semantics<parallel>, #tpu.dimension_semantics<parallel>, #tpu.dimension_semantics<arbitrary>], iteration_bounds = array<i64: 1, 1, 1>, scalar_prefetch = 0 : i64, scratch_operands = 1 : i64, tpu.core_type = #tpu.core_type<tc>, window_params = [{transform_indices = @transform_0, window_bounds = array<i64: 16, 32>}, {transform_indices = @transform_1, window_bounds = array<i64: 32, 96>}, {transform_indices = @transform_2, window_bounds = array<i64: 16, 96>}]} {
    %c0_i32 = arith.constant 0 : i32
    %0 = arith.cmpi eq, %arg2, %c0_i32 : i32
    %1 = arith.extui %0 : i1 to i32
    %c0_i32_0 = arith.constant 0 : i32
    %2 = arith.cmpi ne, %1, %c0_i32_0 : i32
    scf.if %2 {
      %cst_10 = arith.constant 0.000000e+00 : f32
      %12 = vector.broadcast %cst_10 : f32 to vector<16x96xf32>
      %c0_11 = arith.constant 0 : index
      %c0_12 = arith.constant 0 : index
      %13 = vector.load %arg6[%c0_11, %c0_12] : memref<16x96xf32, #tpu.memory_space<vmem>>, vector<16x96xf32>
      tpu.vector_store %arg6[%c0_11, %c0_12], %12 {strides = array<i32>} : memref<16x96xf32, #tpu.memory_space<vmem>>, vector<16x96xf32>,
    } else {
    }
    %c0 = arith.constant 0 : index
    %c0_1 = arith.constant 0 : index
    %3 = vector.load %arg6[%c0, %c0_1] : memref<16x96xf32, #tpu.memory_space<vmem>>, vector<16x96xf32>
    %c0_2 = arith.constant 0 : index
    %c0_3 = arith.constant 0 : index
    %4 = vector.load %arg3[%c0_2, %c0_3] : memref<16x32xbf16, #tpu.memory_space<vmem>>, vector<16x32xbf16>
    %c0_4 = arith.constant 0 : index
    %c0_5 = arith.constant 0 : index
    %5 = vector.load %arg4[%c0_4, %c0_5] : memref<32x96xbf16, #tpu.memory_space<vmem>>, vector<32x96xbf16>
    %cst = arith.constant dense<0.000000e+00> : vector<16x96xf32>
    %6 = tpu.matmul %4, %5, %cst {dimension_numbers = #tpu.dot_dimension_numbers<[1], [0], [0], [1], [0, 0, 1, 1], [], []>} : vector<16x32xbf16>, vector<32x96xbf16>, vector<16x96xf32> -> vector<16x96xf32>
    %7 = arith.addf %3, %6 : vector<16x96xf32>
    %c0_6 = arith.constant 0 : index
    %c0_7 = arith.constant 0 : index
    %8 = vector.load %arg6[%c0_6, %c0_7] : memref<16x96xf32, #tpu.memory_space<vmem>>, vector<16x96xf32>
    tpu.vector_store %arg6[%c0_6, %c0_7], %7 {strides = array<i32>} : memref<16x96xf32, #tpu.memory_space<vmem>>, vector<16x96xf32>,
    %c0_i32_8 = arith.constant 0 : i32
    %9 = arith.cmpi eq, %arg2, %c0_i32_8 : i32
    %10 = arith.extui %9 : i1 to i32
    %c0_i32_9 = arith.constant 0 : i32
    %11 = arith.cmpi ne, %10, %c0_i32_9 : i32
    scf.if %11 {
      %c0_10 = arith.constant 0 : index
      %c0_11 = arith.constant 0 : index
      %12 = vector.load %arg6[%c0_10, %c0_11] : memref<16x96xf32, #tpu.memory_space<vmem>>, vector<16x96xf32>
      %13 = arith.truncf %12 : vector<16x96xf32> to vector<16x96xbf16>
      %c0_12 = arith.constant 0 : index
      %c0_13 = arith.constant 0 : index
      %14 = vector.load %arg5[%c0_12, %c0_13] : memref<16x96xbf16, #tpu.memory_space<vmem>>, vector<16x96xbf16>
      tpu.vector_store %arg5[%c0_12, %c0_13], %13 {strides = array<i32>} : memref<16x96xbf16, #tpu.memory_space<vmem>>, vector<16x96xbf16>,
    } else {
    }
    return
  }
  func.func @transform_0(%arg0: i32, %arg1: i32, %arg2: i32) -> (i32, i32) {
    %c0_i32 = arith.constant 0 : i32
    return %arg0, %arg2 : i32, i32
  }
  func.func @transform_1(%arg0: i32, %arg1: i32, %arg2: i32) -> (i32, i32) {
    %c0_i32 = arith.constant 0 : i32
    return %arg2, %arg1 : i32, i32
  }
  func.func @transform_2(%arg0: i32, %arg1: i32, %arg2: i32) -> (i32, i32) {
    %c0_i32 = arith.constant 0 : i32
    return %arg0, %arg1 : i32, i32
  }
}

module attributes {stable_mosaic.version = 11 : i64} {
  func.func @_flash_attn_kernel(%arg0: i32, %arg1: i32, %arg2: i32, %arg3: memref<1xi32, #tpu.memory_space<smem>>, %arg4: memref<1xi32, #tpu.memory_space<smem>>, %arg5: memref<1x1x8x8xbf16, #tpu.memory_space<vmem>>, %arg6: memref<1x1x8x8xbf16, #tpu.memory_space<vmem>>, %arg7: memref<1x1x8x8xbf16, #tpu.memory_space<vmem>>, %arg8: memref<1x1x8x8xbf16, #tpu.memory_space<vmem>>, %arg9: memref<8x1xf32, #tpu.memory_space<vmem>>, %arg10: memref<8x1xf32, #tpu.memory_space<vmem>>, %arg11: memref<8x8xf32, #tpu.memory_space<vmem>>) attributes {dimension_semantics = [#tpu.dimension_semantics<parallel>, #tpu.dimension_semantics<parallel>, #tpu.dimension_semantics<arbitrary>], iteration_bounds = array<i64: 2, 4, 1>, scalar_prefetch = 2 : i64, scratch_operands = 3 : i64, tpu.core_type = #tpu.core_type<tc>, window_params = [{transform_indices = @transform_0, window_bounds = array<i64: 1, 1, 8, 8>}, {transform_indices = @transform_1, window_bounds = array<i64: 1, 1, 8, 8>}, {transform_indices = @transform_2, window_bounds = array<i64: 1, 1, 8, 8>}, {transform_indices = @transform_3, window_bounds = array<i64: 1, 1, 8, 8>}]} {
    %0 = arith.index_cast %arg2 : i32 to index
    %1 = memref.load %arg3[%0] : memref<1xi32, #tpu.memory_space<smem>>
    %2 = arith.index_cast %arg2 : i32 to index
    %3 = memref.load %arg4[%2] : memref<1xi32, #tpu.memory_space<smem>>
    %c0_i32 = arith.constant 0 : i32
    %4 = arith.cmpi eq, %3, %c0_i32 : i32
    %5 = arith.extui %4 : i1 to i32
    %c0_i32_0 = arith.constant 0 : i32
    %6 = arith.cmpi ne, %5, %c0_i32_0 : i32
    scf.if %6 {
      %cst_31 = arith.constant -1.000000e+30 : f32
      %53 = vector.broadcast %cst_31 : f32 to vector<8x1xf32>
      %c0_32 = arith.constant 0 : index
      %c0_33 = arith.constant 0 : index
      %54 = vector.load %arg9[%c0_32, %c0_33] : memref<8x1xf32, #tpu.memory_space<vmem>>, vector<8x1xf32>
      tpu.vector_store %arg9[%c0_32, %c0_33], %53 {strides = array<i32>} : memref<8x1xf32, #tpu.memory_space<vmem>>, vector<8x1xf32>,
      %cst_34 = arith.constant 0.000000e+00 : f32
      %55 = vector.broadcast %cst_34 : f32 to vector<8x1xf32>
      %c0_35 = arith.constant 0 : index
      %c0_36 = arith.constant 0 : index
      %56 = vector.load %arg10[%c0_35, %c0_36] : memref<8x1xf32, #tpu.memory_space<vmem>>, vector<8x1xf32>
      tpu.vector_store %arg10[%c0_35, %c0_36], %55 {strides = array<i32>} : memref<8x1xf32, #tpu.memory_space<vmem>>, vector<8x1xf32>,
      %cst_37 = arith.constant 0.000000e+00 : f32
      %57 = vector.broadcast %cst_37 : f32 to vector<8x8xf32>
      %c0_38 = arith.constant 0 : index
      %c0_39 = arith.constant 0 : index
      %58 = vector.load %arg11[%c0_38, %c0_39] : memref<8x8xf32, #tpu.memory_space<vmem>>, vector<8x8xf32>
      tpu.vector_store %arg11[%c0_38, %c0_39], %57 {strides = array<i32>} : memref<8x8xf32, #tpu.memory_space<vmem>>, vector<8x8xf32>,
    } else {
    }
    %c0 = arith.constant 0 : index
    %c0_1 = arith.constant 0 : index
    %c0_2 = arith.constant 0 : index
    %c0_3 = arith.constant 0 : index
    %7 = vector.load %arg5[%c0, %c0_1, %c0_2, %c0_3] : memref<1x1x8x8xbf16, #tpu.memory_space<vmem>>, vector<1x1x8x8xbf16>
    %8 = vector.shape_cast %7 : vector<1x1x8x8xbf16> to vector<8x8xbf16>
    %c0_4 = arith.constant 0 : index
    %c0_5 = arith.constant 0 : index
    %c0_6 = arith.constant 0 : index
    %c0_7 = arith.constant 0 : index
    %9 = vector.load %arg6[%c0_4, %c0_5, %c0_6, %c0_7] : memref<1x1x8x8xbf16, #tpu.memory_space<vmem>>, vector<1x1x8x8xbf16>
    %10 = vector.shape_cast %9 : vector<1x1x8x8xbf16> to vector<8x8xbf16>
    %c0_8 = arith.constant 0 : index
    %c0_9 = arith.constant 0 : index
    %c0_10 = arith.constant 0 : index
    %c0_11 = arith.constant 0 : index
    %11 = vector.load %arg7[%c0_8, %c0_9, %c0_10, %c0_11] : memref<1x1x8x8xbf16, #tpu.memory_space<vmem>>, vector<1x1x8x8xbf16>
    %12 = vector.shape_cast %11 : vector<1x1x8x8xbf16> to vector<8x8xbf16>
    %cst = arith.constant dense<0.000000e+00> : vector<8x8xf32>
    %13 = tpu.matmul %8, %10, %cst {dimension_numbers = #tpu.dot_dimension_numbers<[1], [1], [0], [0], [0, 0, 1, 0], [], []>} : vector<8x8xbf16>, vector<8x8xbf16>, vector<8x8xf32> -> vector<8x8xf32>
    %cst_12 = arith.constant 0.353553385 : f32
    %14 = vector.broadcast %cst_12 : f32 to vector<8x8xf32>
    %15 = arith.mulf %13, %14 : vector<8x8xf32>
    %c8_i32 = arith.constant 8 : i32
    %16 = arith.muli %1, %c8_i32 : i32
    %17 = tpu.iota {dimensions = array<i32: 0>} : vector<8x8xi32>
    %18 = vector.broadcast %16 : i32 to vector<8x8xi32>
    %19 = arith.addi %18, %17 : vector<8x8xi32>
    %c8_i32_13 = arith.constant 8 : i32
    %20 = arith.muli %3, %c8_i32_13 : i32
    %21 = tpu.iota {dimensions = array<i32: 1>} : vector<8x8xi32>
    %22 = vector.broadcast %20 : i32 to vector<8x8xi32>
    %23 = arith.addi %22, %21 : vector<8x8xi32>
    %24 = arith.cmpi sle, %23, %19 : vector<8x8xi32>
    %cst_14 = arith.constant -1.000000e+30 : f32
    %25 = vector.broadcast %cst_14 : f32 to vector<8x8xf32>
    %26 = arith.select %24, %15, %25 : vector<8x8xi1>, vector<8x8xf32>
    %c0_15 = arith.constant 0 : index
    %c0_16 = arith.constant 0 : index
    %27 = vector.load %arg9[%c0_15, %c0_16] : memref<8x1xf32, #tpu.memory_space<vmem>>, vector<8x1xf32>
    %cst_17 = arith.constant dense<0xFF800000> : vector<8xf32>
    %28 = vector.multi_reduction <maximumf>, %26, %cst_17 [1] : vector<8x8xf32> to vector<8xf32>
    %29 = vector.shape_cast %28 : vector<8xf32> to vector<8x1xf32>
    %30 = arith.maximumf %27, %29 : vector<8x1xf32>
    %31 = arith.subf %27, %30 : vector<8x1xf32>
    %32 = math.exp %31 : vector<8x1xf32>
    %33 = vector.broadcast %30 : vector<8x1xf32> to vector<8x8xf32>
    %34 = arith.subf %26, %33 : vector<8x8xf32>
    %35 = math.exp %34 : vector<8x8xf32>
    %c0_18 = arith.constant 0 : index
    %c0_19 = arith.constant 0 : index
    %36 = vector.load %arg10[%c0_18, %c0_19] : memref<8x1xf32, #tpu.memory_space<vmem>>, vector<8x1xf32>
    %37 = arith.mulf %32, %36 : vector<8x1xf32>
    %cst_20 = arith.constant dense<0.000000e+00> : vector<8xf32>
    %38 = vector.multi_reduction <add>, %35, %cst_20 [1] : vector<8x8xf32> to vector<8xf32>
    %39 = vector.shape_cast %38 : vector<8xf32> to vector<8x1xf32>
    %40 = arith.addf %37, %39 : vector<8x1xf32>
    %c0_21 = arith.constant 0 : index
    %c0_22 = arith.constant 0 : index
    %41 = vector.load %arg10[%c0_21, %c0_22] : memref<8x1xf32, #tpu.memory_space<vmem>>, vector<8x1xf32>
    tpu.vector_store %arg10[%c0_21, %c0_22], %40 {strides = array<i32>} : memref<8x1xf32, #tpu.memory_space<vmem>>, vector<8x1xf32>,
    %c0_23 = arith.constant 0 : index
    %c0_24 = arith.constant 0 : index
    %42 = vector.load %arg11[%c0_23, %c0_24] : memref<8x8xf32, #tpu.memory_space<vmem>>, vector<8x8xf32>
    %43 = vector.broadcast %32 : vector<8x1xf32> to vector<8x8xf32>
    %44 = arith.mulf %43, %42 : vector<8x8xf32>
    %45 = arith.truncf %35 : vector<8x8xf32> to vector<8x8xbf16>
    %cst_25 = arith.constant dense<0.000000e+00> : vector<8x8xf32>
    %46 = tpu.matmul %45, %12, %cst_25 {dimension_numbers = #tpu.dot_dimension_numbers<[1], [0], [0], [1], [0, 0, 1, 1], [], []>} : vector<8x8xbf16>, vector<8x8xbf16>, vector<8x8xf32> -> vector<8x8xf32>
    %47 = arith.addf %44, %46 : vector<8x8xf32>
    %c0_26 = arith.constant 0 : index
    %c0_27 = arith.constant 0 : index
    %48 = vector.load %arg11[%c0_26, %c0_27] : memref<8x8xf32, #tpu.memory_space<vmem>>, vector<8x8xf32>
    tpu.vector_store %arg11[%c0_26, %c0_27], %47 {strides = array<i32>} : memref<8x8xf32, #tpu.memory_space<vmem>>, vector<8x8xf32>,
    %c0_28 = arith.constant 0 : index
    %c0_29 = arith.constant 0 : index
    %49 = vector.load %arg9[%c0_28, %c0_29] : memref<8x1xf32, #tpu.memory_space<vmem>>, vector<8x1xf32>
    tpu.vector_store %arg9[%c0_28, %c0_29], %30 {strides = array<i32>} : memref<8x1xf32, #tpu.memory_space<vmem>>, vector<8x1xf32>,
    %50 = arith.cmpi eq, %3, %1 : i32
    %51 = arith.extui %50 : i1 to i32
    %c0_i32_30 = arith.constant 0 : i32
    %52 = arith.cmpi ne, %51, %c0_i32_30 : i32
    scf.if %52 {
      %c0_31 = arith.constant 0 : index
      %c0_32 = arith.constant 0 : index
      %53 = vector.load %arg10[%c0_31, %c0_32] : memref<8x1xf32, #tpu.memory_space<vmem>>, vector<8x1xf32>
      %54 = tpu.reciprocal %53 {approx = true} : vector<8x1xf32> -> vector<8x1xf32>
      %c0_33 = arith.constant 0 : index
      %c0_34 = arith.constant 0 : index
      %55 = vector.load %arg11[%c0_33, %c0_34] : memref<8x8xf32, #tpu.memory_space<vmem>>, vector<8x8xf32>
      %56 = vector.broadcast %54 : vector<8x1xf32> to vector<8x8xf32>
      %57 = arith.mulf %55, %56 : vector<8x8xf32>
      %58 = arith.truncf %57 : vector<8x8xf32> to vector<8x8xbf16>
      %c0_35 = arith.constant 0 : index
      %c0_36 = arith.constant 0 : index
      %c0_37 = arith.constant 0 : index
      %c0_38 = arith.constant 0 : index
      %59 = vector.load %arg8[%c0_35, %c0_36, %c0_37, %c0_38] : memref<1x1x8x8xbf16, #tpu.memory_space<vmem>>, vector<1x1x8x8xbf16>
      %60 = vector.shape_cast %59 : vector<1x1x8x8xbf16> to vector<8x8xbf16>
      %61 = vector.shape_cast %58 : vector<8x8xbf16> to vector<1x1x8x8xbf16>
      tpu.vector_store %arg8[%c0_35, %c0_36, %c0_37, %c0_38], %61 {strides = array<i32>} : memref<1x1x8x8xbf16, #tpu.memory_space<vmem>>, vector<1x1x8x8xbf16>,
    } else {
    }
    return
  }
  func.func @transform_0(%arg0: i32, %arg1: i32, %arg2: i32, %arg3: memref<1xi32, #tpu.memory_space<smem>>, %arg4: memref<1xi32, #tpu.memory_space<smem>>) -> (i32, i32, i32, i32) {
    %0 = arith.index_cast %arg2 : i32 to index
    %1 = memref.load %arg3[%0] : memref<1xi32, #tpu.memory_space<smem>>
    %c0_i32 = arith.constant 0 : i32
    %c0_i32_0 = arith.constant 0 : i32
    return %arg0, %arg1, %1, %c0_i32 : i32, i32, i32, i32
  }
  func.func @transform_1(%arg0: i32, %arg1: i32, %arg2: i32, %arg3: memref<1xi32, #tpu.memory_space<smem>>, %arg4: memref<1xi32, #tpu.memory_space<smem>>) -> (i32, i32, i32, i32) {
    %0 = arith.index_cast %arg2 : i32 to index
    %1 = memref.load %arg4[%0] : memref<1xi32, #tpu.memory_space<smem>>
    %c0_i32 = arith.constant 0 : i32
    %c0_i32_0 = arith.constant 0 : i32
    return %arg0, %arg1, %1, %c0_i32 : i32, i32, i32, i32
  }
  func.func @transform_2(%arg0: i32, %arg1: i32, %arg2: i32, %arg3: memref<1xi32, #tpu.memory_space<smem>>, %arg4: memref<1xi32, #tpu.memory_space<smem>>) -> (i32, i32, i32, i32) {
    %0 = arith.index_cast %arg2 : i32 to index
    %1 = memref.load %arg4[%0] : memref<1xi32, #tpu.memory_space<smem>>
    %c0_i32 = arith.constant 0 : i32
    %c0_i32_0 = arith.constant 0 : i32
    return %arg0, %arg1, %1, %c0_i32 : i32, i32, i32, i32
  }
  func.func @transform_3(%arg0: i32, %arg1: i32, %arg2: i32, %arg3: memref<1xi32, #tpu.memory_space<smem>>, %arg4: memref<1xi32, #tpu.memory_space<smem>>) -> (i32, i32, i32, i32) {
    %0 = arith.index_cast %arg2 : i32 to index
    %1 = memref.load %arg3[%0] : memref<1xi32, #tpu.memory_space<smem>>
    %c0_i32 = arith.constant 0 : i32
    %c0_i32_0 = arith.constant 0 : i32
    return %arg0, %arg1, %1, %c0_i32 : i32, i32, i32, i32
  }
}

module attributes {stable_mosaic.version = 11 : i64} {
  func.func @_matmul_kernel(%arg0: i32, %arg1: i32, %arg2: i32, %arg3: memref<16x32xbf16, #tpu.memory_space<vmem>>, %arg4: memref<32x32xbf16, #tpu.memory_space<vmem>>, %arg5: memref<16x32xf32, #tpu.memory_space<vmem>>, %arg6: memref<16x32xf32, #tpu.memory_space<vmem>>, %arg7: memref<16x32xf32, #tpu.memory_space<vmem>>) attributes {dimension_semantics = [#tpu.dimension_semantics<parallel>, #tpu.dimension_semantics<parallel>, #tpu.dimension_semantics<arbitrary>], iteration_bounds = array<i64: 1, 1, 1>, scalar_prefetch = 0 : i64, scratch_operands = 1 : i64, tpu.core_type = #tpu.core_type<tc>, window_params = [{transform_indices = @transform_0, window_bounds = array<i64: 16, 32>}, {transform_indices = @transform_1, window_bounds = array<i64: 32, 32>}, {transform_indices = @transform_2, window_bounds = array<i64: 16, 32>}, {transform_indices = @transform_3, window_bounds = array<i64: 16, 32>}]} {
    %c0_i32 = arith.constant 0 : i32
    %0 = arith.cmpi eq, %arg2, %c0_i32 : i32
    %1 = arith.extui %0 : i1 to i32
    %c0_i32_0 = arith.constant 0 : i32
    %2 = arith.cmpi ne, %1, %c0_i32_0 : i32
    scf.if %2 {
      %cst_10 = arith.constant 0.000000e+00 : f32
      %12 = vector.broadcast %cst_10 : f32 to vector<16x32xf32>
      %c0_11 = arith.constant 0 : index
      %c0_12 = arith.constant 0 : index
      %13 = vector.load %arg7[%c0_11, %c0_12] : memref<16x32xf32, #tpu.memory_space<vmem>>, vector<16x32xf32>
      tpu.vector_store %arg7[%c0_11, %c0_12], %12 {strides = array<i32>} : memref<16x32xf32, #tpu.memory_space<vmem>>, vector<16x32xf32>,
    } else {
    }
    %c0 = arith.constant 0 : index
    %c0_1 = arith.constant 0 : index
    %3 = vector.load %arg7[%c0, %c0_1] : memref<16x32xf32, #tpu.memory_space<vmem>>, vector<16x32xf32>
    %c0_2 = arith.constant 0 : index
    %c0_3 = arith.constant 0 : index
    %4 = vector.load %arg3[%c0_2, %c0_3] : memref<16x32xbf16, #tpu.memory_space<vmem>>, vector<16x32xbf16>
    %c0_4 = arith.constant 0 : index
    %c0_5 = arith.constant 0 : index
    %5 = vector.load %arg4[%c0_4, %c0_5] : memref<32x32xbf16, #tpu.memory_space<vmem>>, vector<32x32xbf16>
    %cst = arith.constant dense<0.000000e+00> : vector<16x32xf32>
    %6 = tpu.matmul %4, %5, %cst {dimension_numbers = #tpu.dot_dimension_numbers<[1], [0], [0], [1], [0, 0, 1, 1], [], []>} : vector<16x32xbf16>, vector<32x32xbf16>, vector<16x32xf32> -> vector<16x32xf32>
    %7 = arith.addf %3, %6 : vector<16x32xf32>
    %c0_6 = arith.constant 0 : index
    %c0_7 = arith.constant 0 : index
    %8 = vector.load %arg7[%c0_6, %c0_7] : memref<16x32xf32, #tpu.memory_space<vmem>>, vector<16x32xf32>
    tpu.vector_store %arg7[%c0_6, %c0_7], %7 {strides = array<i32>} : memref<16x32xf32, #tpu.memory_space<vmem>>, vector<16x32xf32>,
    %c0_i32_8 = arith.constant 0 : i32
    %9 = arith.cmpi eq, %arg2, %c0_i32_8 : i32
    %10 = arith.extui %9 : i1 to i32
    %c0_i32_9 = arith.constant 0 : i32
    %11 = arith.cmpi ne, %10, %c0_i32_9 : i32
    scf.if %11 {
      %c0_10 = arith.constant 0 : index
      %c0_11 = arith.constant 0 : index
      %12 = vector.load %arg7[%c0_10, %c0_11] : memref<16x32xf32, #tpu.memory_space<vmem>>, vector<16x32xf32>
      %c0_12 = arith.constant 0 : index
      %c0_13 = arith.constant 0 : index
      %13 = vector.load %arg5[%c0_12, %c0_13] : memref<16x32xf32, #tpu.memory_space<vmem>>, vector<16x32xf32>
      %14 = arith.addf %12, %13 : vector<16x32xf32>
      %c0_14 = arith.constant 0 : index
      %c0_15 = arith.constant 0 : index
      %15 = vector.load %arg6[%c0_14, %c0_15] : memref<16x32xf32, #tpu.memory_space<vmem>>, vector<16x32xf32>
      tpu.vector_store %arg6[%c0_14, %c0_15], %14 {strides = array<i32>} : memref<16x32xf32, #tpu.memory_space<vmem>>, vector<16x32xf32>,
    } else {
    }
    return
  }
  func.func @transform_0(%arg0: i32, %arg1: i32, %arg2: i32) -> (i32, i32) {
    %c0_i32 = arith.constant 0 : i32
    return %arg0, %arg2 : i32, i32
  }
  func.func @transform_1(%arg0: i32, %arg1: i32, %arg2: i32) -> (i32, i32) {
    %c0_i32 = arith.constant 0 : i32
    return %arg2, %arg1 : i32, i32
  }
  func.func @transform_2(%arg0: i32, %arg1: i32, %arg2: i32) -> (i32, i32) {
    %c0_i32 = arith.constant 0 : i32
    return %arg0, %arg1 : i32, i32
  }
  func.func @transform_3(%arg0: i32, %arg1: i32, %arg2: i32) -> (i32, i32) {
    %c0_i32 = arith.constant 0 : i32
    return %arg0, %arg1 : i32, i32
  }
}

module attributes {stable_mosaic.version = 11 : i64} {
  func.func @_matmul_kernel(%arg0: i32, %arg1: i32, %arg2: i32, %arg3: memref<16x32xbf16, #tpu.memory_space<vmem>>, %arg4: memref<32x128xbf16, #tpu.memory_space<vmem>>, %arg5: memref<16x128xbf16, #tpu.memory_space<vmem>>, %arg6: memref<16x128xf32, #tpu.memory_space<vmem>>) attributes {dimension_semantics = [#tpu.dimension_semantics<parallel>, #tpu.dimension_semantics<parallel>, #tpu.dimension_semantics<arbitrary>], iteration_bounds = array<i64: 1, 1, 1>, scalar_prefetch = 0 : i64, scratch_operands = 1 : i64, tpu.core_type = #tpu.core_type<tc>, window_params = [{transform_indices = @transform_0, window_bounds = array<i64: 16, 32>}, {transform_indices = @transform_1, window_bounds = array<i64: 32, 128>}, {transform_indices = @transform_2, window_bounds = array<i64: 16, 128>}]} {
    %c0_i32 = arith.constant 0 : i32
    %0 = arith.cmpi eq, %arg2, %c0_i32 : i32
    %1 = arith.extui %0 : i1 to i32
    %c0_i32_0 = arith.constant 0 : i32
    %2 = arith.cmpi ne, %1, %c0_i32_0 : i32
    scf.if %2 {
      %cst_10 = arith.constant 0.000000e+00 : f32
      %12 = vector.broadcast %cst_10 : f32 to vector<16x128xf32>
      %c0_11 = arith.constant 0 : index
      %c0_12 = arith.constant 0 : index
      %13 = vector.load %arg6[%c0_11, %c0_12] : memref<16x128xf32, #tpu.memory_space<vmem>>, vector<16x128xf32>
      tpu.vector_store %arg6[%c0_11, %c0_12], %12 {strides = array<i32>} : memref<16x128xf32, #tpu.memory_space<vmem>>, vector<16x128xf32>,
    } else {
    }
    %c0 = arith.constant 0 : index
    %c0_1 = arith.constant 0 : index
    %3 = vector.load %arg6[%c0, %c0_1] : memref<16x128xf32, #tpu.memory_space<vmem>>, vector<16x128xf32>
    %c0_2 = arith.constant 0 : index
    %c0_3 = arith.constant 0 : index
    %4 = vector.load %arg3[%c0_2, %c0_3] : memref<16x32xbf16, #tpu.memory_space<vmem>>, vector<16x32xbf16>
    %c0_4 = arith.constant 0 : index
    %c0_5 = arith.constant 0 : index
    %5 = vector.load %arg4[%c0_4, %c0_5] : memref<32x128xbf16, #tpu.memory_space<vmem>>, vector<32x128xbf16>
    %cst = arith.constant dense<0.000000e+00> : vector<16x128xf32>
    %6 = tpu.matmul %4, %5, %cst {dimension_numbers = #tpu.dot_dimension_numbers<[1], [0], [0], [1], [0, 0, 1, 1], [], []>} : vector<16x32xbf16>, vector<32x128xbf16>, vector<16x128xf32> -> vector<16x128xf32>
    %7 = arith.addf %3, %6 : vector<16x128xf32>
    %c0_6 = arith.constant 0 : index
    %c0_7 = arith.constant 0 : index
    %8 = vector.load %arg6[%c0_6, %c0_7] : memref<16x128xf32, #tpu.memory_space<vmem>>, vector<16x128xf32>
    tpu.vector_store %arg6[%c0_6, %c0_7], %7 {strides = array<i32>} : memref<16x128xf32, #tpu.memory_space<vmem>>, vector<16x128xf32>,
    %c0_i32_8 = arith.constant 0 : i32
    %9 = arith.cmpi eq, %arg2, %c0_i32_8 : i32
    %10 = arith.extui %9 : i1 to i32
    %c0_i32_9 = arith.constant 0 : i32
    %11 = arith.cmpi ne, %10, %c0_i32_9 : i32
    scf.if %11 {
      %c0_10 = arith.constant 0 : index
      %c0_11 = arith.constant 0 : index
      %12 = vector.load %arg6[%c0_10, %c0_11] : memref<16x128xf32, #tpu.memory_space<vmem>>, vector<16x128xf32>
      %cst_12 = arith.constant 5.000000e-01 : f32
      %13 = vector.broadcast %cst_12 : f32 to vector<16x128xf32>
      %14 = arith.mulf %13, %12 : vector<16x128xf32>
      %cst_13 = arith.constant 0.707106769 : f32
      %15 = vector.broadcast %cst_13 : f32 to vector<16x128xf32>
      %16 = arith.mulf %12, %15 : vector<16x128xf32>
      %cst_14 = arith.constant 0.000000e+00 : f32
      %17 = vector.broadcast %cst_14 : f32 to vector<16x128xf32>
      %18 = arith.cmpf oge, %16, %17 : vector<16x128xf32>
      %cst_15 = arith.constant 1.000000e+00 : f32
      %cst_16 = arith.constant -1.000000e+00 : f32
      %19 = vector.broadcast %cst_15 : f32 to vector<16x128xf32>
      %20 = vector.broadcast %cst_16 : f32 to vector<16x128xf32>
      %21 = arith.select %18, %19, %20 : vector<16x128xi1>, vector<16x128xf32>
      %22 = math.absf %16 : vector<16x128xf32>
      %cst_17 = arith.constant 0.327591091 : f32
      %23 = vector.broadcast %cst_17 : f32 to vector<16x128xf32>
      %24 = arith.mulf %23, %22 : vector<16x128xf32>
      %cst_18 = arith.constant 1.000000e+00 : f32
      %25 = vector.broadcast %cst_18 : f32 to vector<16x128xf32>
      %26 = arith.addf %25, %24 : vector<16x128xf32>
      %cst_19 = arith.constant 1.000000e+00 : f32
      %27 = vector.broadcast %cst_19 : f32 to vector<16x128xf32>
      %28 = arith.divf %27, %26 : vector<16x128xf32>
      %cst_20 = arith.constant 1.06140542 : f32
      %29 = vector.broadcast %cst_20 : f32 to vector<16x128xf32>
      %30 = arith.mulf %29, %28 : vector<16x128xf32>
      %cst_21 = arith.constant -1.45315206 : f32
      %31 = vector.broadcast %cst_21 : f32 to vector<16x128xf32>
      %32 = arith.addf %30, %31 : vector<16x128xf32>
      %33 = arith.mulf %32, %28 : vector<16x128xf32>
      %cst_22 = arith.constant 1.42141378 : f32
      %34 = vector.broadcast %cst_22 : f32 to vector<16x128xf32>
      %35 = arith.addf %33, %34 : vector<16x128xf32>
      %36 = arith.mulf %35, %28 : vector<16x128xf32>
      %cst_23 = arith.constant -0.284496725 : f32
      %37 = vector.broadcast %cst_23 : f32 to vector<16x128xf32>
      %38 = arith.addf %36, %37 : vector<16x128xf32>
      %39 = arith.mulf %38, %28 : vector<16x128xf32>
      %cst_24 = arith.constant 0.254829586 : f32
      %40 = vector.broadcast %cst_24 : f32 to vector<16x128xf32>
      %41 = arith.addf %39, %40 : vector<16x128xf32>
      %42 = arith.mulf %41, %28 : vector<16x128xf32>
      %cst_25 = arith.constant 0.000000e+00 : f32
      %43 = vector.broadcast %cst_25 : f32 to vector<16x128xf32>
      %44 = arith.subf %43, %22 : vector<16x128xf32>
      %45 = arith.mulf %44, %22 : vector<16x128xf32>
      %46 = math.exp %45 : vector<16x128xf32>
      %47 = arith.mulf %42, %46 : vector<16x128xf32>
      %cst_26 = arith.constant 1.000000e+00 : f32
      %48 = vector.broadcast %cst_26 : f32 to vector<16x128xf32>
      %49 = arith.subf %48, %47 : vector<16x128xf32>
      %50 = arith.mulf %21, %49 : vector<16x128xf32>
      %cst_27 = arith.constant 1.000000e+00 : f32
      %51 = vector.broadcast %cst_27 : f32 to vector<16x128xf32>
      %52 = arith.addf %51, %50 : vector<16x128xf32>
      %53 = arith.mulf %14, %52 : vector<16x128xf32>
      %54 = arith.truncf %53 : vector<16x128xf32> to vector<16x128xbf16>
      %c0_28 = arith.constant 0 : index
      %c0_29 = arith.constant 0 : index
      %55 = vector.load %arg5[%c0_28, %c0_29] : memref<16x128xbf16, #tpu.memory_space<vmem>>, vector<16x128xbf16>
      tpu.vector_store %arg5[%c0_28, %c0_29], %54 {strides = array<i32>} : memref<16x128xbf16, #tpu.memory_space<vmem>>, vector<16x128xbf16>,
    } else {
    }
    return
  }
  func.func @transform_0(%arg0: i32, %arg1: i32, %arg2: i32) -> (i32, i32) {
    %c0_i32 = arith.constant 0 : i32
    return %arg0, %arg2 : i32, i32
  }
  func.func @transform_1(%arg0: i32, %arg1: i32, %arg2: i32) -> (i32, i32) {
    %c0_i32 = arith.constant 0 : i32
    return %arg2, %arg1 : i32, i32
  }
  func.func @transform_2(%arg0: i32, %arg1: i32, %arg2: i32) -> (i32, i32) {
    %c0_i32 = arith.constant 0 : i32
    return %arg0, %arg1 : i32, i32
  }
}

module attributes {stable_mosaic.version = 11 : i64} {
  func.func @_matmul_kernel(%arg0: i32, %arg1: i32, %arg2: i32, %arg3: memref<16x128xbf16, #tpu.memory_space<vmem>>, %arg4: memref<128x32xbf16, #tpu.memory_space<vmem>>, %arg5: memref<16x32xf32, #tpu.memory_space<vmem>>, %arg6: memref<16x32xf32, #tpu.memory_space<vmem>>, %arg7: memref<16x32xf32, #tpu.memory_space<vmem>>) attributes {dimension_semantics = [#tpu.dimension_semantics<parallel>, #tpu.dimension_semantics<parallel>, #tpu.dimension_semantics<arbitrary>], iteration_bounds = array<i64: 1, 1, 1>, scalar_prefetch = 0 : i64, scratch_operands = 1 : i64, tpu.core_type = #tpu.core_type<tc>, window_params = [{transform_indices = @transform_0, window_bounds = array<i64: 16, 128>}, {transform_indices = @transform_1, window_bounds = array<i64: 128, 32>}, {transform_indices = @transform_2, window_bounds = array<i64: 16, 32>}, {transform_indices = @transform_3, window_bounds = array<i64: 16, 32>}]} {
    %c0_i32 = arith.constant 0 : i32
    %0 = arith.cmpi eq, %arg2, %c0_i32 : i32
    %1 = arith.extui %0 : i1 to i32
    %c0_i32_0 = arith.constant 0 : i32
    %2 = arith.cmpi ne, %1, %c0_i32_0 : i32
    scf.if %2 {
      %cst_10 = arith.constant 0.000000e+00 : f32
      %12 = vector.broadcast %cst_10 : f32 to vector<16x32xf32>
      %c0_11 = arith.constant 0 : index
      %c0_12 = arith.constant 0 : index
      %13 = vector.load %arg7[%c0_11, %c0_12] : memref<16x32xf32, #tpu.memory_space<vmem>>, vector<16x32xf32>
      tpu.vector_store %arg7[%c0_11, %c0_12], %12 {strides = array<i32>} : memref<16x32xf32, #tpu.memory_space<vmem>>, vector<16x32xf32>,
    } else {
    }
    %c0 = arith.constant 0 : index
    %c0_1 = arith.constant 0 : index
    %3 = vector.load %arg7[%c0, %c0_1] : memref<16x32xf32, #tpu.memory_space<vmem>>, vector<16x32xf32>
    %c0_2 = arith.constant 0 : index
    %c0_3 = arith.constant 0 : index
    %4 = vector.load %arg3[%c0_2, %c0_3] : memref<16x128xbf16, #tpu.memory_space<vmem>>, vector<16x128xbf16>
    %c0_4 = arith.constant 0 : index
    %c0_5 = arith.constant 0 : index
    %5 = vector.load %arg4[%c0_4, %c0_5] : memref<128x32xbf16, #tpu.memory_space<vmem>>, vector<128x32xbf16>
    %cst = arith.constant dense<0.000000e+00> : vector<16x32xf32>
    %6 = tpu.matmul %4, %5, %cst {dimension_numbers = #tpu.dot_dimension_numbers<[1], [0], [0], [1], [0, 0, 1, 1], [], []>} : vector<16x128xbf16>, vector<128x32xbf16>, vector<16x32xf32> -> vector<16x32xf32>
    %7 = arith.addf %3, %6 : vector<16x32xf32>
    %c0_6 = arith.constant 0 : index
    %c0_7 = arith.constant 0 : index
    %8 = vector.load %arg7[%c0_6, %c0_7] : memref<16x32xf32, #tpu.memory_space<vmem>>, vector<16x32xf32>
    tpu.vector_store %arg7[%c0_6, %c0_7], %7 {strides = array<i32>} : memref<16x32xf32, #tpu.memory_space<vmem>>, vector<16x32xf32>,
    %c0_i32_8 = arith.constant 0 : i32
    %9 = arith.cmpi eq, %arg2, %c0_i32_8 : i32
    %10 = arith.extui %9 : i1 to i32
    %c0_i32_9 = arith.constant 0 : i32
    %11 = arith.cmpi ne, %10, %c0_i32_9 : i32
    scf.if %11 {
      %c0_10 = arith.constant 0 : index
      %c0_11 = arith.constant 0 : index
      %12 = vector.load %arg7[%c0_10, %c0_11] : memref<16x32xf32, #tpu.memory_space<vmem>>, vector<16x32xf32>
      %c0_12 = arith.constant 0 : index
      %c0_13 = arith.constant 0 : index
      %13 = vector.load %arg5[%c0_12, %c0_13] : memref<16x32xf32, #tpu.memory_space<vmem>>, vector<16x32xf32>
      %14 = arith.addf %12, %13 : vector<16x32xf32>
      %c0_14 = arith.constant 0 : index
      %c0_15 = arith.constant 0 : index
      %15 = vector.load %arg6[%c0_14, %c0_15] : memref<16x32xf32, #tpu.memory_space<vmem>>, vector<16x32xf32>
      tpu.vector_store %arg6[%c0_14, %c0_15], %14 {strides = array<i32>} : memref<16x32xf32, #tpu.memory_space<vmem>>, vector<16x32xf32>,
    } else {
    }
    return
  }
  func.func @transform_0(%arg0: i32, %arg1: i32, %arg2: i32) -> (i32, i32) {
    %c0_i32 = arith.constant 0 : i32
    return %arg0, %arg2 : i32, i32
  }
  func.func @transform_1(%arg0: i32, %arg1: i32, %arg2: i32) -> (i32, i32) {
    %c0_i32 = arith.constant 0 : i32
    return %arg2, %arg1 : i32, i32
  }
  func.func @transform_2(%arg0: i32, %arg1: i32, %arg2: i32) -> (i32, i32) {
    %c0_i32 = arith.constant 0 : i32
    return %arg0, %arg1 : i32, i32
  }
  func.func @transform_3(%arg0: i32, %arg1: i32, %arg2: i32) -> (i32, i32) {
    %c0_i32 = arith.constant 0 : i32
    return %arg0, %arg1 : i32, i32
  }
}

module attributes {stable_mosaic.version = 11 : i64} {
  func.func @_lmhead_ce_kernel(%arg0: i32, %arg1: i32, %arg2: memref<14x32xbf16, #tpu.memory_space<vmem>>, %arg3: memref<32x128xbf16, #tpu.memory_space<vmem>>, %arg4: memref<14x1xi32, #tpu.memory_space<vmem>>, %arg5: memref<14x128xf32, #tpu.memory_space<vmem>>, %arg6: memref<14x1xf32, #tpu.memory_space<vmem>>, %arg7: memref<14x1xf32, #tpu.memory_space<vmem>>, %arg8: memref<14x1xf32, #tpu.memory_space<vmem>>, %arg9: memref<14x1xf32, #tpu.memory_space<vmem>>) attributes {dimension_semantics = [#tpu.dimension_semantics<parallel>, #tpu.dimension_semantics<arbitrary>], iteration_bounds = array<i64: 1, 1>, scalar_prefetch = 0 : i64, scratch_operands = 3 : i64, tpu.core_type = #tpu.core_type<tc>, window_params = [{transform_indices = @transform_0, window_bounds = array<i64: 14, 32>}, {transform_indices = @transform_1, window_bounds = array<i64: 32, 128>}, {transform_indices = @transform_2, window_bounds = array<i64: 14, 1>}, {transform_indices = @transform_3, window_bounds = array<i64: 14, 128>}, {transform_indices = @transform_4, window_bounds = array<i64: 14, 1>}]} {
    %c0_i32 = arith.constant 0 : i32
    %0 = arith.cmpi eq, %arg1, %c0_i32 : i32
    %1 = arith.extui %0 : i1 to i32
    %c0_i32_0 = arith.constant 0 : i32
    %2 = arith.cmpi ne, %1, %c0_i32_0 : i32
    scf.if %2 {
      %cst_28 = arith.constant -1.000000e+30 : f32
      %46 = vector.broadcast %cst_28 : f32 to vector<14x1xf32>
      %c0_29 = arith.constant 0 : index
      %c0_30 = arith.constant 0 : index
      %47 = vector.load %arg7[%c0_29, %c0_30] : memref<14x1xf32, #tpu.memory_space<vmem>>, vector<14x1xf32>
      tpu.vector_store %arg7[%c0_29, %c0_30], %46 {strides = array<i32>} : memref<14x1xf32, #tpu.memory_space<vmem>>, vector<14x1xf32>,
      %cst_31 = arith.constant 0.000000e+00 : f32
      %48 = vector.broadcast %cst_31 : f32 to vector<14x1xf32>
      %c0_32 = arith.constant 0 : index
      %c0_33 = arith.constant 0 : index
      %49 = vector.load %arg8[%c0_32, %c0_33] : memref<14x1xf32, #tpu.memory_space<vmem>>, vector<14x1xf32>
      tpu.vector_store %arg8[%c0_32, %c0_33], %48 {strides = array<i32>} : memref<14x1xf32, #tpu.memory_space<vmem>>, vector<14x1xf32>,
      %cst_34 = arith.constant 0.000000e+00 : f32
      %50 = vector.broadcast %cst_34 : f32 to vector<14x1xf32>
      %c0_35 = arith.constant 0 : index
      %c0_36 = arith.constant 0 : index
      %51 = vector.load %arg9[%c0_35, %c0_36] : memref<14x1xf32, #tpu.memory_space<vmem>>, vector<14x1xf32>
      tpu.vector_store %arg9[%c0_35, %c0_36], %50 {strides = array<i32>} : memref<14x1xf32, #tpu.memory_space<vmem>>, vector<14x1xf32>,
    } else {
    }
    %c0 = arith.constant 0 : index
    %c0_1 = arith.constant 0 : index
    %3 = vector.load %arg2[%c0, %c0_1] : memref<14x32xbf16, #tpu.memory_space<vmem>>, vector<14x32xbf16>
    %c0_2 = arith.constant 0 : index
    %c0_3 = arith.constant 0 : index
    %4 = vector.load %arg3[%c0_2, %c0_3] : memref<32x128xbf16, #tpu.memory_space<vmem>>, vector<32x128xbf16>
    %cst = arith.constant dense<0.000000e+00> : vector<14x128xf32>
    %5 = tpu.matmul %3, %4, %cst {dimension_numbers = #tpu.dot_dimension_numbers<[1], [0], [0], [1], [0, 0, 1, 1], [], []>} : vector<14x32xbf16>, vector<32x128xbf16>, vector<14x128xf32> -> vector<14x128xf32>
    %c0_4 = arith.constant 0 : index
    %c0_5 = arith.constant 0 : index
    %6 = vector.load %arg5[%c0_4, %c0_5] : memref<14x128xf32, #tpu.memory_space<vmem>>, vector<14x128xf32>
    tpu.vector_store %arg5[%c0_4, %c0_5], %5 {strides = array<i32>} : memref<14x128xf32, #tpu.memory_space<vmem>>, vector<14x128xf32>,
    %c128_i32 = arith.constant 128 : i32
    %7 = arith.muli %arg1, %c128_i32 : i32
    %8 = tpu.iota {dimensions = array<i32: 1>} : vector<14x128xi32>
    %9 = vector.broadcast %7 : i32 to vector<14x128xi32>
    %10 = arith.addi %9, %8 : vector<14x128xi32>
    %c64_i32 = arith.constant 64 : i32
    %11 = vector.broadcast %c64_i32 : i32 to vector<14x128xi32>
    %12 = arith.cmpi slt, %10, %11 : vector<14x128xi32>
    %cst_6 = arith.constant -1.000000e+30 : f32
    %13 = vector.broadcast %cst_6 : f32 to vector<14x128xf32>
    %14 = arith.select %12, %5, %13 : vector<14x128xi1>, vector<14x128xf32>
    %c0_7 = arith.constant 0 : index
    %c0_8 = arith.constant 0 : index
    %15 = vector.load %arg7[%c0_7, %c0_8] : memref<14x1xf32, #tpu.memory_space<vmem>>, vector<14x1xf32>
    %cst_9 = arith.constant dense<0xFF800000> : vector<14xf32>
    %16 = vector.multi_reduction <maximumf>, %14, %cst_9 [1] : vector<14x128xf32> to vector<14xf32>
    %17 = vector.shape_cast %16 : vector<14xf32> to vector<14x1xf32>
    %18 = arith.maximumf %15, %17 : vector<14x1xf32>
    %19 = vector.broadcast %18 : vector<14x1xf32> to vector<14x128xf32>
    %20 = arith.subf %5, %19 : vector<14x128xf32>
    %21 = math.exp %20 : vector<14x128xf32>
    %cst_10 = arith.constant 0.000000e+00 : f32
    %22 = vector.broadcast %cst_10 : f32 to vector<14x128xf32>
    %23 = arith.select %12, %21, %22 : vector<14x128xi1>, vector<14x128xf32>
    %c0_11 = arith.constant 0 : index
    %c0_12 = arith.constant 0 : index
    %24 = vector.load %arg8[%c0_11, %c0_12] : memref<14x1xf32, #tpu.memory_space<vmem>>, vector<14x1xf32>
    %25 = arith.subf %15, %18 : vector<14x1xf32>
    %26 = math.exp %25 : vector<14x1xf32>
    %27 = arith.mulf %24, %26 : vector<14x1xf32>
    %cst_13 = arith.constant dense<0.000000e+00> : vector<14xf32>
    %28 = vector.multi_reduction <add>, %23, %cst_13 [1] : vector<14x128xf32> to vector<14xf32>
    %29 = vector.shape_cast %28 : vector<14xf32> to vector<14x1xf32>
    %30 = arith.addf %27, %29 : vector<14x1xf32>
    %c0_14 = arith.constant 0 : index
    %c0_15 = arith.constant 0 : index
    %31 = vector.load %arg8[%c0_14, %c0_15] : memref<14x1xf32, #tpu.memory_space<vmem>>, vector<14x1xf32>
    tpu.vector_store %arg8[%c0_14, %c0_15], %30 {strides = array<i32>} : memref<14x1xf32, #tpu.memory_space<vmem>>, vector<14x1xf32>,
    %c0_16 = arith.constant 0 : index
    %c0_17 = arith.constant 0 : index
    %32 = vector.load %arg7[%c0_16, %c0_17] : memref<14x1xf32, #tpu.memory_space<vmem>>, vector<14x1xf32>
    tpu.vector_store %arg7[%c0_16, %c0_17], %18 {strides = array<i32>} : memref<14x1xf32, #tpu.memory_space<vmem>>, vector<14x1xf32>,
    %c0_18 = arith.constant 0 : index
    %c0_19 = arith.constant 0 : index
    %33 = vector.load %arg9[%c0_18, %c0_19] : memref<14x1xf32, #tpu.memory_space<vmem>>, vector<14x1xf32>
    %c0_20 = arith.constant 0 : index
    %c0_21 = arith.constant 0 : index
    %34 = vector.load %arg4[%c0_20, %c0_21] : memref<14x1xi32, #tpu.memory_space<vmem>>, vector<14x1xi32>
    %35 = vector.broadcast %34 : vector<14x1xi32> to vector<14x128xi32>
    %36 = arith.cmpi eq, %10, %35 : vector<14x128xi32>
    %cst_22 = arith.constant 0.000000e+00 : f32
    %37 = vector.broadcast %cst_22 : f32 to vector<14x128xf32>
    %38 = arith.select %36, %5, %37 : vector<14x128xi1>, vector<14x128xf32>
    %cst_23 = arith.constant dense<0.000000e+00> : vector<14xf32>
    %39 = vector.multi_reduction <add>, %38, %cst_23 [1] : vector<14x128xf32> to vector<14xf32>
    %40 = vector.shape_cast %39 : vector<14xf32> to vector<14x1xf32>
    %41 = arith.addf %33, %40 : vector<14x1xf32>
    %c0_24 = arith.constant 0 : index
    %c0_25 = arith.constant 0 : index
    %42 = vector.load %arg9[%c0_24, %c0_25] : memref<14x1xf32, #tpu.memory_space<vmem>>, vector<14x1xf32>
    tpu.vector_store %arg9[%c0_24, %c0_25], %41 {strides = array<i32>} : memref<14x1xf32, #tpu.memory_space<vmem>>, vector<14x1xf32>,
    %c0_i32_26 = arith.constant 0 : i32
    %43 = arith.cmpi eq, %arg1, %c0_i32_26 : i32
    %44 = arith.extui %43 : i1 to i32
    %c0_i32_27 = arith.constant 0 : i32
    %45 = arith.cmpi ne, %44, %c0_i32_27 : i32
    scf.if %45 {
      %c0_28 = arith.constant 0 : index
      %c0_29 = arith.constant 0 : index
      %46 = vector.load %arg7[%c0_28, %c0_29] : memref<14x1xf32, #tpu.memory_space<vmem>>, vector<14x1xf32>
      %c0_30 = arith.constant 0 : index
      %c0_31 = arith.constant 0 : index
      %47 = vector.load %arg8[%c0_30, %c0_31] : memref<14x1xf32, #tpu.memory_space<vmem>>, vector<14x1xf32>
      %48 = math.log %47 : vector<14x1xf32>
      %49 = arith.addf %46, %48 : vector<14x1xf32>
      %c0_32 = arith.constant 0 : index
      %c0_33 = arith.constant 0 : index
      %50 = vector.load %arg9[%c0_32, %c0_33] : memref<14x1xf32, #tpu.memory_space<vmem>>, vector<14x1xf32>
      %51 = arith.subf %49, %50 : vector<14x1xf32>
      %c0_34 = arith.constant 0 : index
      %c0_35 = arith.constant 0 : index
      %52 = vector.load %arg6[%c0_34, %c0_35] : memref<14x1xf32, #tpu.memory_space<vmem>>, vector<14x1xf32>
      tpu.vector_store %arg6[%c0_34, %c0_35], %51 {strides = array<i32>} : memref<14x1xf32, #tpu.memory_space<vmem>>, vector<14x1xf32>,
    } else {
    }
    return
  }
  func.func @transform_0(%arg0: i32, %arg1: i32) -> (i32, i32) {
    %c0_i32 = arith.constant 0 : i32
    %c0_i32_0 = arith.constant 0 : i32
    return %arg0, %c0_i32 : i32, i32
  }
  func.func @transform_1(%arg0: i32, %arg1: i32) -> (i32, i32) {
    %c0_i32 = arith.constant 0 : i32
    %c0_i32_0 = arith.constant 0 : i32
    return %c0_i32, %arg1 : i32, i32
  }
  func.func @transform_2(%arg0: i32, %arg1: i32) -> (i32, i32) {
    %c0_i32 = arith.constant 0 : i32
    %c0_i32_0 = arith.constant 0 : i32
    return %arg0, %c0_i32 : i32, i32
  }
  func.func @transform_3(%arg0: i32, %arg1: i32) -> (i32, i32) {
    %c0_i32 = arith.constant 0 : i32
    return %arg0, %arg1 : i32, i32
  }
  func.func @transform_4(%arg0: i32, %arg1: i32) -> (i32, i32) {
    %c0_i32 = arith.constant 0 : i32
    %c0_i32_0 = arith.constant 0 : i32
    return %arg0, %c0_i32 : i32, i32
  }
}

</mosaic_0001>

<llo_original>
// kernel: gpt_forward.17
$region0: #{gpt_forward.17}
  #allocation0 [shape = 'u32[]', space=smem, size = 0x4, offset = 0x4, fixed_abs, tag = 'smem constant byte address 0x4 - core index']
  #allocation1 [shape = 'u32[72,128]{1,0:T(1,128)}', space=vmem, size = 0x9000, scoped, tag = 'internal scratch']
  #allocation2 [shape = 'f32[16,96]{1,0:T(8,128)}', space=vmem, size = 0x2000, scoped, tag = 'scratch operand']
  %s0 = inlined_call_operand.vmem [shape: bf16[16,32], index: 0, kind: input, shape index: {}]
  %s1 = inlined_call_operand.vmem [shape: bf16[32,96], index: 1, kind: input, shape index: {}]
  %s2 = inlined_call_operand.vmem [shape: bf16[16,96], index: 2, kind: output, shape index: {}]
  %s3 = sld [smem:[#allocation0]]
  $region26: #{gpt_forward.17} parent=0
    _
  %s5 = ssub.s32 1, %s3
  %s6 = scalar_select 0, %s5, %s3
  // Predicated region
  $region2: #{gpt_forward.17} parent=0 // pred_check
    _
  $region3: #{gpt_forward.17} parent=0 // pred_check_branch
    %8 = sbr.rel (0) target = $region5
  $region4: #{gpt_forward.17} parent=0 // pred_region
    _
  $region5: #{gpt_forward.17} parent=0 // pred_fallthru
    _
  // Predicated region
  $region6: #{gpt_forward.17} parent=0 // pred_check
    _
  $region7: #{gpt_forward.17} parent=0 // pred_check_branch
    %10 = sbr.rel (0) target = $region9
  $region8: #{gpt_forward.17} parent=0 // pred_region
    _
  $region9: #{gpt_forward.17} parent=0 // pred_fallthru
    _
  %p12 = scmp.eq.s32.totalorder 0, 0
  // Predicated region
  $region10: #{gpt_forward.17} parent=0 // pred_check
    %p13 = pneg %p12
  $region11: #{gpt_forward.17} parent=0 // pred_check_branch
    %15 = sbr.rel (%p13) target = $region13
  $region12: #{gpt_forward.17} parent=0 // pred_region
    %vm16 = vcmask 785408
    %17 = vst.msk [vmem:[#allocation2] sm:$0xff] %vm16, 0.0
    %18 = vst.msk [vmem:[#allocation2 + $0x8] sm:$0xff] %vm16, 0.0
  $region13: #{gpt_forward.17} parent=0 // pred_fallthru
    _
  %v19 = vld [vmem:[#allocation2] sm:$0xff]
  %v20 = vld [vmem:[#allocation2 + $0x8] sm:$0xff]
  %v21 = vld [vmem:[%s0] sm:$0xf]
  %v22 = vld [vmem:[%s0 + $0x4] sm:$0xf]
  %v23 = vld [vmem:[%s1] sm:$0xf]
  %v24 = vld [vmem:[%s1 + $0x4] sm:$0xf]
  %v25 = vld [vmem:[%s1 + $0x8] sm:$0xf]
  %v26 = vld [vmem:[%s1 + $0xc] sm:$0xf]
  %v29 = vunpack.c.l.b16 %v21
  %v30 = vunpack.c.l.b16 %v22
  %v31 = vpack.c.b16 %v30, %v29
  %v36 = vunpack.c.l.b16 %v23
  %v37 = vunpack.c.l.b16 %v24
  %v38 = vunpack.c.l.b16 %v25
  %v39 = vunpack.c.l.b16 %v26
  %v40 = vpack.c.b16 %v37, %v36
  %v41 = vpack.c.b16 %v39, %v38
  %vm44 = vcmask 261120
  %v46 = vsel %vm44, %v31, 0
  %48 = vmatpush.bf16.msra.mxu0 0
  %49 = vmatpush.bf16.msra.mxu0 0
  %50 = vmatpush.bf16.msra.mxu0 0
  %51 = vmatpush.bf16.msra.mxu0 0
  %52 = vmatpush.bf16.msra.mxu0 0
  %53 = vmatpush.bf16.msra.mxu0 0
  %54 = vmatpush.bf16.msra.mxu0 %v41
  %55 = vmatpush.bf16.msra.mxu0 %v40
  %56 = vmatmul.bf16.gmra.mxu0 %v46
  %v57 = vpop.f32.mrf.mxu0
  %v58 = vadd.f32 0.0, %v57
  %v59 = vpop.f32.mrf.mxu0
  %v60 = vadd.f32 0.0, %v59
  %61 = vdwg.mxu0
  %v62 = vadd.f32 %v19, %v58
  %v63 = vadd.f32 %v20, %v60
  %vm64 = vcmask 785408
  %65 = vst.msk [vmem:[#allocation2] sm:$0xff] %vm64, %v62
  %66 = vst.msk [vmem:[#allocation2 + $0x8] sm:$0xff] %vm64, %v63
  // Predicated region
  $region14: #{gpt_forward.17} parent=0 // pred_check
    %p67 = pneg %p12
  $region15: #{gpt_forward.17} parent=0 // pred_check_branch
    %69 = sbr.rel (%p67) target = $region17
  $region16: #{gpt_forward.17} parent=0 // pred_region
    %v70 = vld [vmem:[#allocation2] sm:$0xff]
    %v71 = vld [vmem:[#allocation2 + $0x8] sm:$0xff]
    %v72 = vpack.c.bf16 %v70, %v70
    %v73 = vpack.c.bf16 %v71, %v71
    %vm74 = vcmask 781312
    %75 = vst.msk [vmem:[%s2] sm:$0xf] %vm74, %v72
    %76 = vst.msk [vmem:[%s2 + $0x4] sm:$0xf] %vm74, %v73
  $region17: #{gpt_forward.17} parent=0 // pred_fallthru
    _
  // Predicated region
  $region18: #{gpt_forward.17} parent=0 // pred_check
    _
  $region19: #{gpt_forward.17} parent=0 // pred_check_branch
    %78 = sbr.rel (0) target = $region21
  $region20: #{gpt_forward.17} parent=0 // pred_region
    _
  $region21: #{gpt_forward.17} parent=0 // pred_fallthru
    _
  // Predicated region
  $region22: #{gpt_forward.17} parent=0 // pred_check
    _
  $region23: #{gpt_forward.17} parent=0 // pred_check_branch
    %80 = sbr.rel (0) target = $region25
  $region24: #{gpt_forward.17} parent=0 // pred_region
    _
  $region25: #{gpt_forward.17} parent=0 // pred_fallthru
    _

// kernel: gpt_forward.16
$region0: #{gpt_forward.16}
  #allocation0 [shape = 'u32[]', space=smem, size = 0x4, offset = 0x4, fixed_abs, tag = 'smem constant byte address 0x4 - core index']
  #allocation1 [shape = 'u32[72,128]{1,0:T(1,128)}', space=vmem, size = 0x9000, scoped, tag = 'internal scratch']
  %s0 = inlined_call_operand.vmem [shape: f32[16,32], index: 0, kind: input, shape index: {}]
  %s1 = inlined_call_operand.vmem [shape: f32[1,32], index: 1, kind: input, shape index: {}]
  %s2 = inlined_call_operand.vmem [shape: bf16[16,32], index: 2, kind: output, shape index: {}]
  %s3 = sld [smem:[#allocation0]]
  $region18: #{gpt_forward.16} parent=0
    _
  %s5 = ssub.s32 1, %s3
  %s6 = scalar_select 0, %s5, %s3
  // Predicated region
  $region2: #{gpt_forward.16} parent=0 // pred_check
    _
  $region3: #{gpt_forward.16} parent=0 // pred_check_branch
    %8 = sbr.rel (0) target = $region5
  $region4: #{gpt_forward.16} parent=0 // pred_region
    _
  $region5: #{gpt_forward.16} parent=0 // pred_fallthru
    _
  // Predicated region
  $region6: #{gpt_forward.16} parent=0 // pred_check
    _
  $region7: #{gpt_forward.16} parent=0 // pred_check_branch
    %10 = sbr.rel (0) target = $region9
  $region8: #{gpt_forward.16} parent=0 // pred_region
    _
  $region9: #{gpt_forward.16} parent=0 // pred_fallthru
    _
  %v11 = vld [vmem:[%s0] sm:$0xff]
  %v12 = vld [vmem:[%s0 + $0x8] sm:$0xff]
  %vm13 = vcmask 261120
  %v14 = vsel %vm13, %v11, 0.0
  %15 = vadd.xlane.f32.xlu0 %v14
  %v16 = vpop.xlane.xlu0 %15
  %v17 = vsel %vm13, %v12, 0.0
  %18 = vadd.xlane.f32.xlu0 %v17
  %v19 = vpop.xlane.xlu0 %18
  %v20 = vrcp.pop 32.0
  %v21 = vmul.f32 32.0, %v20
  %v22 = vsub.f32 1.0, %v21
  %v23 = vmul.f32 %v20, %v22
  %v24 = vadd.f32 %v20, %v23
  %vm25 = vweird.f32 %v20
  %v26 = vsel %vm25, %v20, %v24
  %v27 = vmul.f32 %v16, %v26
  %v28 = vmul.f32 %v19, %v26
  %v29 = vsub.f32 %v11, %v27
  %v30 = vsub.f32 %v12, %v28
  %v31 = vmul.f32 %v29, %v29
  %v32 = vmul.f32 %v30, %v30
  %v33 = vsel %vm13, %v31, 0.0
  %34 = vadd.xlane.f32.xlu0 %v33
  %v35 = vpop.xlane.xlu0 %34
  %v36 = vsel %vm13, %v32, 0.0
  %37 = vadd.xlane.f32.xlu0 %v36
  %v38 = vpop.xlane.xlu0 %37
  %v39 = vmul.f32 %v35, %v26
  %v40 = vmul.f32 %v38, %v26
  %v41 = vadd.f32 %v39, 1e-05
  %v42 = vadd.f32 %v40, 1e-05
  %v43 = vrsqrt.pop %v41
  %v44 = vmul.f32 %v43, %v41
  %v45 = vmul.f32 %v44, %v43
  %v46 = vmul.f32 0.5, %v45
  %v47 = vsub.f32 1.5, %v46
  %v48 = vmul.f32 %v43, %v47
  %vm49 = vweird.f32 %v41
  %vm50 = vweird.f32 %v43
  %vm51 = vmor %vm49, %vm50
  %v52 = vsel %vm51, %v43, %v48
  %v53 = vrsqrt.pop %v42
  %v54 = vmul.f32 %v53, %v42
  %v55 = vmul.f32 %v54, %v53
  %v56 = vmul.f32 0.5, %v55
  %v57 = vsub.f32 1.5, %v56
  %v58 = vmul.f32 %v53, %v57
  %vm59 = vweird.f32 %v42
  %vm60 = vweird.f32 %v53
  %vm61 = vmor %vm59, %vm60
  %v62 = vsel %vm61, %v53, %v58
  %v63 = vmul.f32 %v29, %v52
  %v64 = vmul.f32 %v30, %v62
  %v65 = vld [vmem:[%s1] sm:$0x1]
  %v67 = vperm.slane %v65, 0
  %v69 = vmul.f32 %v63, %v67
  %v70 = vmul.f32 %v64, %v67
  %v71 = vpack.c.bf16 %v69, %v69
  %v72 = vpack.c.bf16 %v70, %v70
  %vm73 = vcmask 257024
  %74 = vst.msk [vmem:[%s2] sm:$0xf] %vm73, %v71
  %75 = vst.msk [vmem:[%s2 + $0x4] sm:$0xf] %vm73, %v72
  // Predicated region
  $region10: #{gpt_forward.16} parent=0 // pred_check
    _
  $region11: #{gpt_forward.16} parent=0 // pred_check_branch
    %77 = sbr.rel (0) target = $region13
  $region12: #{gpt_forward.16} parent=0 // pred_region
    _
  $region13: #{gpt_forward.16} parent=0 // pred_fallthru
    _
  // Predicated region
  $region14: #{gpt_forward.16} parent=0 // pred_check
    _
  $region15: #{gpt_forward.16} parent=0 // pred_check_branch
    %79 = sbr.rel (0) target = $region17
  $region16: #{gpt_forward.16} parent=0 // pred_region
    _
  $region17: #{gpt_forward.16} parent=0 // pred_fallthru
    _

// kernel: gpt_forward.18
$region0: #{gpt_forward.18}
  #allocation0 [shape = 'u32[]', space=smem, size = 0x4, offset = 0x4, fixed_abs, tag = 'smem constant byte address 0x4 - core index']
  #allocation1 [shape = 'u32[72,128]{1,0:T(1,128)}', space=vmem, size = 0x9000, scoped, tag = 'internal scratch']
  #allocation2 [shape = 'f32[8,1]{1,0:T(8,128)}', space=vmem, size = 0x1000, scoped, tag = 'scratch operand']
  #allocation3 [shape = 'f32[8,1]{1,0:T(8,128)}', space=vmem, size = 0x1000, scoped, tag = 'scratch operand']
  #allocation4 [shape = 'f32[8,8]{1,0:T(8,128)}', space=vmem, size = 0x1000, scoped, tag = 'scratch operand']
  #allocation5 [shape = 's32[1]{0}', space=sflag, size = 0x4, scoped, tag = 'scoped memory for gpt_forward.18']
  #allocation6 [shape = 's32[1]{0:T(128)S(6)}', space=smem, size = 0x200, scoped, tag = 'prefetched SMEM operand 0']
  #allocation7 [shape = 's32[1]{0:T(128)S(6)}', space=smem, size = 0x200, scoped, tag = 'prefetched SMEM operand 1']
  %s0 = inlined_call_operand.<no memory space> [shape: s32[1], index: 0, kind: input, shape index: {}, may-alias: {0,1}]
  %s1 = inlined_call_operand.<no memory space> [shape: s32[1], index: 1, kind: input, shape index: {}, may-alias: {0,1}]
  %s2 = inlined_call_operand.vmem [shape: bf16[2,4,8,8], index: 2, kind: input, shape index: {}]
  %s3 = inlined_call_operand.vmem [shape: bf16[2,4,8,8], index: 3, kind: input, shape index: {}]
  %s4 = inlined_call_operand.vmem [shape: bf16[2,4,8,8], index: 4, kind: input, shape index: {}]
  %s5 = inlined_call_operand.vmem [shape: bf16[2,4,8,8], index: 5, kind: output, shape index: {}]
  %s6 = sld [smem:[#allocation0]]
  $region53: #{gpt_forward.18} parent=0
    _
  %s8 = ssub.s32 1, %s6
  %s9 = scalar_select 0, %s8, %s6
  %10 = sst [smem:[#allocation6]] %s0
  %11 = sst [smem:[#allocation7]] %s1
  loop: start=0, step=1, limit=10
  $region2: #{gpt_forward.18} parent=0 // loop_pre_header
    _
  $region3: #{gpt_forward.18} parent=0 // loop_header
    %s13 = sphi 0, %s17
    %p14 = scmp.ge.s32.totalorder %s13, 10
    %s20 = sphi 0, %s39
    %s21 = sphi 0, %s35
    %s22 = sphi 0, %s31
    %s23 = sphi 0, %s20
    %s24 = sphi 0, %s21
    %s25 = sphi 0, %s22
    %s26 = sphi 0, %s23
    %s27 = sphi 0, %s24
    %s28 = sphi 0, %s25
    %s48 = sphi 0, %s50
    %s51 = sphi 0, %s48
    %s52 = sphi 0, %s51
    %s68 = sphi 0, %s52
    %s80 = sphi 0, %s82
    %s83 = sphi 0, %s80
    %s84 = sphi 0, %s83
    %s100 = sphi 0, %s84
    %s112 = sphi 0, %s114
    %s115 = sphi 0, %s112
    %s116 = sphi 0, %s115
    %s132 = sphi 0, %s116
    %s144 = sphi 0, %s146
    %s147 = sphi 0, %s144
    %s148 = sphi 0, %s147
    %s164 = sphi 0, %s148
  $region4: #{gpt_forward.18} parent=0 // loop_header_branch
    %16 = sbr.rel (%p14) target = $region8
  $region5: #{gpt_forward.18} parent=0 // loop_body
    %s18 = ssub.s32 %s13, 1
    %s19 = ssub.s32 %s13, 2
    %s29 = sadd.s32 1, %s22
    %p30 = scmp.ge.s32.totalorder %s29, 1
    %s31 = scalar_select %p30, 0, %s29
    %s32 = sadd.s32 1, %s21
    %s33 = scalar_select %p30, %s32, %s21
    %p34 = scmp.ge.s32.totalorder %s33, 4
    %s35 = scalar_select %p34, 0, %s33
    %s36 = sadd.s32 1, %s20
    %s37 = scalar_select %p34, %s36, %s20
    %p38 = scmp.ge.s32.totalorder %s37, 2
    %s39 = scalar_select %p38, 0, %s37
    %s40 = sld [smem:[#allocation6 + %s22]]
    %s41 = sld [smem:[#allocation6 + %s31]]
    %s42 = ssub.s32 %s20, %s39
    %s43 = ssub.s32 %s21, %s35
    %s44 = sor.u32 %s42, %s43
    %s45 = ssub.s32 %s40, %s41
    %s46 = sor.u32 %s44, %s45
    %p47 = scmp.eq.s32.totalorder %s46, 0
    %s49 = sadd.s32 %s48, 1
    %s50 = scalar_select %p47, %s48, %s49
    %p53 = pneg %p47
    %p54 = scmp.eq.s32.totalorder %s13, 7
    %p55 = por %p53, %p54
    %p56 = scmp.ne.s32.totalorder %s48, %s51
    %p57 = scmp.eq.s32.totalorder %s13, 0
    %p58 = por %p56, %p57
    %p59 = scmp.ne.s32.totalorder %s48, %s51
    %p60 = scmp.eq.s32.totalorder %s18, 7
    %p61 = por %p59, %p60
    %p62 = scmp.ne.s32.totalorder %s51, %s52
    %p63 = scmp.eq.s32.totalorder %s18, 0
    %p64 = por %p62, %p63
    %p65 = scmp.ne.s32.totalorder %s51, %s52
    %p66 = scmp.eq.s32.totalorder %s19, 7
    %p67 = por %p65, %p66
    %p69 = scmp.ne.s32.totalorder %s52, %s68
    %p70 = scmp.eq.s32.totalorder %s19, 0
    %p71 = por %p69, %p70
    %s72 = sld [smem:[#allocation7 + %s22]]
    %s73 = sld [smem:[#allocation7 + %s31]]
    %s74 = ssub.s32 %s20, %s39
    %s75 = ssub.s32 %s21, %s35
    %s76 = sor.u32 %s74, %s75
    %s77 = ssub.s32 %s72, %s73
    %s78 = sor.u32 %s76, %s77
    %p79 = scmp.eq.s32.totalorder %s78, 0
    %s81 = sadd.s32 %s80, 1
    %s82 = scalar_select %p79, %s80, %s81
    %p85 = pneg %p79
    %p86 = scmp.eq.s32.totalorder %s13, 7
    %p87 = por %p85, %p86
    %p88 = scmp.ne.s32.totalorder %s80, %s83
    %p89 = scmp.eq.s32.totalorder %s13, 0
    %p90 = por %p88, %p89
    %p91 = scmp.ne.s32.totalorder %s80, %s83
    %p92 = scmp.eq.s32.totalorder %s18, 7
    %p93 = por %p91, %p92
    %p94 = scmp.ne.s32.totalorder %s83, %s84
    %p95 = scmp.eq.s32.totalorder %s18, 0
    %p96 = por %p94, %p95
    %p97 = scmp.ne.s32.totalorder %s83, %s84
    %p98 = scmp.eq.s32.totalorder %s19, 7
    %p99 = por %p97, %p98
    %p101 = scmp.ne.s32.totalorder %s84, %s100
    %p102 = scmp.eq.s32.totalorder %s19, 0
    %p103 = por %p101, %p102
    %s104 = sld [smem:[#allocation7 + %s22]]
    %s105 = sld [smem:[#allocation7 + %s31]]
    %s106 = ssub.s32 %s20, %s39
    %s107 = ssub.s32 %s21, %s35
    %s108 = sor.u32 %s106, %s107
    %s109 = ssub.s32 %s104, %s105
    %s110 = sor.u32 %s108, %s109
    %p111 = scmp.eq.s32.totalorder %s110, 0
    %s113 = sadd.s32 %s112, 1
    %s114 = scalar_select %p111, %s112, %s113
    %p117 = pneg %p111
    %p118 = scmp.eq.s32.totalorder %s13, 7
    %p119 = por %p117, %p118
    %p120 = scmp.ne.s32.totalorder %s112, %s115
    %p121 = scmp.eq.s32.totalorder %s13, 0
    %p122 = por %p120, %p121
    %p123 = scmp.ne.s32.totalorder %s112, %s115
    %p124 = scmp.eq.s32.totalorder %s18, 7
    %p125 = por %p123, %p124
    %p126 = scmp.ne.s32.totalorder %s115, %s116
    %p127 = scmp.eq.s32.totalorder %s18, 0
    %p128 = por %p126, %p127
    %p129 = scmp.ne.s32.totalorder %s115, %s116
    %p130 = scmp.eq.s32.totalorder %s19, 7
    %p131 = por %p129, %p130
    %p133 = scmp.ne.s32.totalorder %s116, %s132
    %p134 = scmp.eq.s32.totalorder %s19, 0
    %p135 = por %p133, %p134
    %s136 = sld [smem:[#allocation6 + %s22]]
    %s137 = sld [smem:[#allocation6 + %s31]]
    %s138 = ssub.s32 %s20, %s39
    %s139 = ssub.s32 %s21, %s35
    %s140 = sor.u32 %s138, %s139
    %s141 = ssub.s32 %s136, %s137
    %s142 = sor.u32 %s140, %s141
    %p143 = scmp.eq.s32.totalorder %s142, 0
    %s145 = sadd.s32 %s144, 1
    %s146 = scalar_select %p143, %s144, %s145
    %p149 = pneg %p143
    %p150 = scmp.eq.s32.totalorder %s13, 7
    %p151 = por %p149, %p150
    %p152 = scmp.ne.s32.totalorder %s144, %s147
    %p153 = scmp.eq.s32.totalorder %s13, 0
    %p154 = por %p152, %p153
    %p155 = scmp.ne.s32.totalorder %s144, %s147
    %p156 = scmp.eq.s32.totalorder %s18, 7
    %p157 = por %p155, %p156
    %p158 = scmp.ne.s32.totalorder %s147, %s148
    %p159 = scmp.eq.s32.totalorder %s18, 0
    %p160 = por %p158, %p159
    %p161 = scmp.ne.s32.totalorder %s147, %s148
    %p162 = scmp.eq.s32.totalorder %s19, 7
    %p163 = por %p161, %p162
    %p165 = scmp.ne.s32.totalorder %s148, %s164
    %p166 = scmp.eq.s32.totalorder %s19, 0
    %p167 = por %p165, %p166
    %p168 = scmp.le.s32.totalorder 1, %s13
    %p169 = scmp.lt.s32.totalorder %s13, 9
    %p170 = pnand %p168, %p169
    %p171 = pneg %p170
    // Predicated region
    $region9: #{gpt_forward.18} parent=5 // pred_check
      _
    $region10: #{gpt_forward.18} parent=5 // pred_check_branch
      %173 = sbr.rel (%p170) target = $region12
    $region11: #{gpt_forward.18} parent=5 // pred_region
      %s174 = ssub.s32 %s13, 1
    $region12: #{gpt_forward.18} parent=5 // pred_fallthru
      _
    %p175 = scmp.lt.s32.totalorder %s13, 8
    // Predicated region
    $region13: #{gpt_forward.18} parent=5 // pred_check
      %p176 = pneg %p175
    $region14: #{gpt_forward.18} parent=5 // pred_check_branch
      %178 = sbr.rel (%p176) target = $region16
    $region15: #{gpt_forward.18} parent=5 // pred_region
      // Predicated region
      $region17: #{gpt_forward.18} parent=15 // pred_check
        %p179 = pneg %p58
      $region18: #{gpt_forward.18} parent=15 // pred_check_branch
        %181 = sbr.rel (%p179) target = $region20
      $region19: #{gpt_forward.18} parent=15 // pred_region
        %s182 = sld [smem:[#allocation6 + %s22]]
        %p183 = scmp.lt.s32.totalorder %s20, 1
        %s184 = scalar_select %p183, %s20, 1
        %p185 = scmp.lt.s32.totalorder %s21, 3
        %s186 = scalar_select %p185, %s21, 3
        %p187 = scmp.lt.s32.totalorder %s182, 0
        %s188 = scalar_select %p187, %s182, 0
        %s189 = sadd.s32 %s188, %s186
        %s190 = smul.addr %s184, 4
        %s191 = sadd.s32 %s189, %s190
        %s192 = smul.addr %s191, 4
        %s193 = scalar_lea.vmem %s2, %s192
        %s194 = sld [smem:[#allocation6 + %s22]]
      $region20: #{gpt_forward.18} parent=15 // pred_fallthru
        _
      // Predicated region
      $region21: #{gpt_forward.18} parent=15 // pred_check
        %p195 = pneg %p90
      $region22: #{gpt_forward.18} parent=15 // pred_check_branch
        %197 = sbr.rel (%p195) target = $region24
      $region23: #{gpt_forward.18} parent=15 // pred_region
        %s198 = sld [smem:[#allocation7 + %s22]]
        %p199 = scmp.lt.s32.totalorder %s20, 1
        %s200 = scalar_select %p199, %s20, 1
        %p201 = scmp.lt.s32.totalorder %s21, 3
        %s202 = scalar_select %p201, %s21, 3
        %p203 = scmp.lt.s32.totalorder %s198, 0
        %s204 = scalar_select %p203, %s198, 0
        %s205 = sadd.s32 %s204, %s202
        %s206 = smul.addr %s200, 4
        %s207 = sadd.s32 %s205, %s206
        %s208 = smul.addr %s207, 4
        %s209 = scalar_lea.vmem %s3, %s208
        %s210 = sld [smem:[#allocation7 + %s22]]
      $region24: #{gpt_forward.18} parent=15 // pred_fallthru
        _
      // Predicated region
      $region25: #{gpt_forward.18} parent=15 // pred_check
        %p211 = pneg %p122
      $region26: #{gpt_forward.18} parent=15 // pred_check_branch
        %213 = sbr.rel (%p211) target = $region28
      $region27: #{gpt_forward.18} parent=15 // pred_region
        %s214 = sld [smem:[#allocation7 + %s22]]
        %p215 = scmp.lt.s32.totalorder %s20, 1
        %s216 = scalar_select %p215, %s20, 1
        %p217 = scmp.lt.s32.totalorder %s21, 3
        %s218 = scalar_select %p217, %s21, 3
        %p219 = scmp.lt.s32.totalorder %s214, 0
        %s220 = scalar_select %p219, %s214, 0
        %s221 = sadd.s32 %s220, %s218
        %s222 = smul.addr %s216, 4
        %s223 = sadd.s32 %s221, %s222
        %s224 = smul.addr %s223, 4
        %s225 = scalar_lea.vmem %s4, %s224
        %s226 = sld [smem:[#allocation7 + %s22]]
      $region28: #{gpt_forward.18} parent=15 // pred_fallthru
        _
    $region16: #{gpt_forward.18} parent=5 // pred_fallthru
      _
    %p227 = scmp.le.s32.totalorder 1, %s13
    %p228 = scmp.lt.s32.totalorder %s13, 9
    %p229 = pnand %p227, %p228
    %p230 = pneg %p229
    // Predicated region
    $region29: #{gpt_forward.18} parent=5 // pred_check
      _
    $region30: #{gpt_forward.18} parent=5 // pred_check_branch
      %232 = sbr.rel (%p229) target = $region32
    $region31: #{gpt_forward.18} parent=5 // pred_region
      %s233 = ssub.s32 %s13, 1
      %s234 = sld [smem:[#allocation6 + %s25]]
      %p235 = scmp.lt.s32.totalorder %s23, 1
      %s236 = scalar_select %p235, %s23, 1
      %p237 = scmp.lt.s32.totalorder %s24, 3
      %s238 = scalar_select %p237, %s24, 3
      %p239 = scmp.lt.s32.totalorder %s234, 0
      %s240 = scalar_select %p239, %s234, 0
      %s241 = sadd.s32 %s240, %s238
      %s242 = smul.addr %s236, 4
      %s243 = sadd.s32 %s241, %s242
      %s244 = smul.addr %s243, 4
      %s245 = scalar_lea.vmem %s2, %s244
      %p246 = pneg %p64
      %p247 = pneg %p61
      %s248 = sld [smem:[#allocation7 + %s25]]
      %p249 = scmp.lt.s32.totalorder %s23, 1
      %s250 = scalar_select %p249, %s23, 1
      %p251 = scmp.lt.s32.totalorder %s24, 3
      %s252 = scalar_select %p251, %s24, 3
      %p253 = scmp.lt.s32.totalorder %s248, 0
      %s254 = scalar_select %p253, %s248, 0
      %s255 = sadd.s32 %s254, %s252
      %s256 = smul.addr %s250, 4
      %s257 = sadd.s32 %s255, %s256
      %s258 = smul.addr %s257, 4
      %s259 = scalar_lea.vmem %s3, %s258
      %p260 = pneg %p96
      %p261 = pneg %p93
      %s262 = sld [smem:[#allocation7 + %s25]]
      %p263 = scmp.lt.s32.totalorder %s23, 1
      %s264 = scalar_select %p263, %s23, 1
      %p265 = scmp.lt.s32.totalorder %s24, 3
      %s266 = scalar_select %p265, %s24, 3
      %p267 = scmp.lt.s32.totalorder %s262, 0
      %s268 = scalar_select %p267, %s262, 0
      %s269 = sadd.s32 %s268, %s266
      %s270 = smul.addr %s264, 4
      %s271 = sadd.s32 %s269, %s270
      %s272 = smul.addr %s271, 4
      %s273 = scalar_lea.vmem %s4, %s272
      %p274 = pneg %p128
      %p275 = pneg %p125
      %p276 = pneg %p160
      %p277 = pneg %p157
      %s278 = sld [smem:[#allocation6 + %s25]]
      %p279 = scmp.lt.s32.totalorder %s23, 1
      %s280 = scalar_select %p279, %s23, 1
      %p281 = scmp.lt.s32.totalorder %s24, 3
      %s282 = scalar_select %p281, %s24, 3
      %p283 = scmp.lt.s32.totalorder %s278, 0
      %s284 = scalar_select %p283, %s278, 0
      %s285 = sadd.s32 %s284, %s282
      %s286 = smul.addr %s280, 4
      %s287 = sadd.s32 %s285, %s286
      %s288 = smul.addr %s287, 4
      %s289 = scalar_lea.vmem %s5, %s288
      %s290 = sld [smem:[#allocation6 + %s25]]
      %p291 = scmp.lt.s32.totalorder %s23, 1
      %s292 = scalar_select %p291, %s23, 1
      %p293 = scmp.lt.s32.totalorder %s24, 3
      %s294 = scalar_select %p293, %s24, 3
      %p295 = scmp.lt.s32.totalorder %s290, 0
      %s296 = scalar_select %p295, %s290, 0
      %s297 = sadd.s32 %s296, %s294
      %s298 = smul.addr %s292, 4
      %s299 = sadd.s32 %s297, %s298
      %s300 = smul.addr %s299, 4
      %s301 = scalar_lea.vmem %s2, %s300
      %s302 = sld [smem:[#allocation6 + %s25]]
      %s303 = sld [smem:[#allocation7 + %s25]]
      %p304 = scmp.lt.s32.totalorder %s23, 1
      %s305 = scalar_select %p304, %s23, 1
      %p306 = scmp.lt.s32.totalorder %s24, 3
      %s307 = scalar_select %p306, %s24, 3
      %p308 = scmp.lt.s32.totalorder %s303, 0
      %s309 = scalar_select %p308, %s303, 0
      %s310 = sadd.s32 %s309, %s307
      %s311 = smul.addr %s305, 4
      %s312 = sadd.s32 %s310, %s311
      %s313 = smul.addr %s312, 4
      %s314 = scalar_lea.vmem %s3, %s313
      %s315 = sld [smem:[#allocation7 + %s25]]
      %s316 = sld [smem:[#allocation7 + %s25]]
      %p317 = scmp.lt.s32.totalorder %s23, 1
      %s318 = scalar_select %p317, %s23, 1
      %p319 = scmp.lt.s32.totalorder %s24, 3
      %s320 = scalar_select %p319, %s24, 3
      %p321 = scmp.lt.s32.totalorder %s316, 0
      %s322 = scalar_select %p321, %s316, 0
      %s323 = sadd.s32 %s322, %s320
      %s324 = smul.addr %s318, 4
      %s325 = sadd.s32 %s323, %s324
      %s326 = smul.addr %s325, 4
      %s327 = scalar_lea.vmem %s4, %s326
      %s328 = sld [smem:[#allocation7 + %s25]]
      %s329 = sld [smem:[#allocation6 + %s25]]
      %p330 = scmp.lt.s32.totalorder %s23, 1
      %s331 = scalar_select %p330, %s23, 1
      %p332 = scmp.lt.s32.totalorder %s24, 3
      %s333 = scalar_select %p332, %s24, 3
      %p334 = scmp.lt.s32.totalorder %s329, 0
      %s335 = scalar_select %p334, %s329, 0
      %s336 = sadd.s32 %s335, %s333
      %s337 = smul.addr %s331, 4
      %s338 = sadd.s32 %s336, %s337
      %s339 = smul.addr %s338, 4
      %s340 = scalar_lea.vmem %s5, %s339
      %s341 = sld [smem:[#allocation6 + %s25]]
      %s343 = sld [smem:[#allocation6 + %s25]]
      %s344 = sld [smem:[#allocation7 + %s25]]
      %p345 = scmp.eq.s32.totalorder %s344, 0
      // Predicated region
      $region33: #{gpt_forward.18} parent=31 // pred_check
        %p346 = pneg %p345
      $region34: #{gpt_forward.18} parent=31 // pred_check_branch
        %348 = sbr.rel (%p346) target = $region36
      $region35: #{gpt_forward.18} parent=31 // pred_region
        %vm349 = vcmask 7168
        %350 = vst.msk [vmem:[#allocation2] sm:$0xff] %vm349, -1e+30
        %351 = vst.msk [vmem:[#allocation3] sm:$0xff] %vm349, 0.0
        %vm352 = vcmask 64512
        %353 = vst.msk [vmem:[#allocation4] sm:$0xff] %vm352, 0.0
      $region36: #{gpt_forward.18} parent=31 // pred_fallthru
        _
      %v354 = vld [vmem:[%s301] sm:$0xf]
      %v355 = vld [vmem:[%s314] sm:$0xf]
      %v356 = vld [vmem:[%s327] sm:$0xf]
      %vm357 = vcmask 64512
      %v359 = vsel %vm357, %v354, 0
      %v362 = vsel %vm357, %v355, 0
      %364 = vmatpush.bf16.xpose.msra.mxu0 0
      %365 = vmatpush.bf16.xpose.msra.mxu0 0
      %366 = vmatpush.bf16.xpose.msra.mxu0 0
      %367 = vmatpush.bf16.xpose.msra.mxu0 0
      %368 = vmatpush.bf16.xpose.msra.mxu0 0
      %369 = vmatpush.bf16.xpose.msra.mxu0 0
      %370 = vmatpush.bf16.xpose.msra.mxu0 0
      %371 = vmatpush.bf16.xpose.msra.mxu0 %v362
      %372 = vmatmul.bf16.gmra.mxu0 %v359
      %v373 = vpop.f32.mrf.mxu0
      %v374 = vadd.f32 0.0, %v373
      %v375 = vpop.f32.mrf.mxu0
      %376 = vdwg.mxu0
      %v377 = vmul.f32 %v374, 0.35355338
      %s378 = smul.u32 %s343, 8
      %v379 = vlaneseq
      %v380 = vshrl.u32 %v379, 7
      %v381 = vstv %s378
      %v382 = vadd.s32 %v381, %v380
      %s383 = smul.u32 %s344, 8
      %v384 = vlaneseq
      %v385 = vand.u32 %v384, 127
      %v386 = vstv %s383
      %v387 = vadd.s32 %v386, %v385
      %vm388 = vcmp.le.s32.totalorder %v387, %v382
      %v389 = vsel %vm388, %v377, -1e+30
      %v390 = vld [vmem:[#allocation2] sm:$0xff]
      %v391 = vsel %vm357, %v389, -inf
      %392 = vmax.xlane.f32.xlu0 %v391
      %v393 = vpop.xlane.xlu0 %392
      %v394 = vmax.f32 %v390, %v393
      %v395 = vsub.f32 %v390, %v394
      %v396 = vmul.f32 %v395, 1.442695
      %v397 = vpow.pop %v396
      %399 = vset.pattern.permute.xlu0 0
      %400 = vperm.xlu0 %399, %v394
      %v401 = vpop.permute.xlu0 %400
      %v403 = vsub.f32 %v389, %v401
      %v404 = vmul.f32 %v403, 1.442695
      %v405 = vpow.pop %v404
      %v406 = vld [vmem:[#allocation3] sm:$0xff]
      %v407 = vmul.f32 %v397, %v406
      %v408 = vsel %vm357, %v405, 0.0
      %409 = vadd.xlane.f32.xlu0 %v408
      %v410 = vpop.xlane.xlu0 %409
      %v411 = vadd.f32 %v407, %v410
      %vm412 = vcmask 7168
      %413 = vst.msk [vmem:[#allocation3] sm:$0xff] %vm412, %v411
      %v414 = vld [vmem:[#allocation4] sm:$0xff]
      %416 = vset.pattern.permute.xlu0 0
      %417 = vperm.xlu0 %416, %v397
      %v418 = vpop.permute.xlu0 %417
      %v420 = vmul.f32 %v418, %v414
      %v421 = vpack.c.bf16 %v405, %v405
      %v423 = vsel %vm357, %v421, 0
      %vm425 = vcmask 1043456
      %v427 = vsel %vm425, %v356, 0
      %429 = vmatpush.bf16.msra.mxu0 0
      %430 = vmatpush.bf16.msra.mxu0 0
      %431 = vmatpush.bf16.msra.mxu0 0
      %432 = vmatpush.bf16.msra.mxu0 0
      %433 = vmatpush.bf16.msra.mxu0 0
      %434 = vmatpush.bf16.msra.mxu0 0
      %435 = vmatpush.bf16.msra.mxu0 0
      %436 = vmatpush.bf16.msra.mxu0 %v427
      %437 = vmatmul.bf16.gmra.mxu0 %v423
      %v438 = vpop.f32.mrf.mxu0
      %v439 = vadd.f32 0.0, %v438
      %v440 = vpop.f32.mrf.mxu0
      %441 = vdwg.mxu0
      %v442 = vadd.f32 %v420, %v439
      %443 = vst.msk [vmem:[#allocation4] sm:$0xff] %vm357, %v442
      %444 = vst.msk [vmem:[#allocation2] sm:$0xff] %vm412, %v394
      %p445 = scmp.eq.s32.totalorder %s344, %s343
      // Predicated region
      $region37: #{gpt_forward.18} parent=31 // pred_check
        %p446 = pneg %p445
      $region38: #{gpt_forward.18} parent=31 // pred_check_branch
        %448 = sbr.rel (%p446) target = $region40
      $region39: #{gpt_forward.18} parent=31 // pred_region
        %v449 = vld [vmem:[#allocation3] sm:$0xff]
        %v450 = vrcp.pop %v449
        %v451 = vld [vmem:[#allocation4] sm:$0xff]
        %453 = vset.pattern.permute.xlu0 0
        %454 = vperm.xlu0 %453, %v450
        %v455 = vpop.permute.xlu0 %454
        %v457 = vmul.f32 %v451, %v455
        %v458 = vpack.c.bf16 %v457, %v457
        %vm459 = vcmask 60416
        %460 = vst.msk [vmem:[%s340] sm:$0xf] %vm459, %v458
      $region40: #{gpt_forward.18} parent=31 // pred_fallthru
        _
      %s461 = sld [smem:[#allocation6 + %s25]]
      %p462 = scmp.lt.s32.totalorder %s23, 1
      %s463 = scalar_select %p462, %s23, 1
      %p464 = scmp.lt.s32.totalorder %s24, 3
      %s465 = scalar_select %p464, %s24, 3
      %p466 = scmp.lt.s32.totalorder %s461, 0
      %s467 = scalar_select %p466, %s461, 0
      %s468 = sadd.s32 %s467, %s465
      %s469 = smul.addr %s463, 4
      %s470 = sadd.s32 %s468, %s469
      %s471 = smul.addr %s470, 4
      %s472 = scalar_lea.vmem %s5, %s471
      // Predicated region
      $region41: #{gpt_forward.18} parent=31 // pred_check
        %p473 = pneg %p157
      $region42: #{gpt_forward.18} parent=31 // pred_check_branch
        %475 = sbr.rel (%p473) target = $region44
      $region43: #{gpt_forward.18} parent=31 // pred_region
        %s476 = sld [smem:[#allocation6 + %s25]]
      $region44: #{gpt_forward.18} parent=31 // pred_fallthru
        _
    $region32: #{gpt_forward.18} parent=5 // pred_fallthru
      _
    %p477 = scmp.le.s32.totalorder 2, %s13
    // Predicated region
    $region45: #{gpt_forward.18} parent=5 // pred_check
      %p478 = pneg %p477
    $region46: #{gpt_forward.18} parent=5 // pred_check_branch
      %480 = sbr.rel (%p478) target = $region48
    $region47: #{gpt_forward.18} parent=5 // pred_region
      %s481 = ssub.s32 %s13, 2
      // Predicated region
      $region49: #{gpt_forward.18} parent=47 // pred_check
        %p482 = pneg %p163
      $region50: #{gpt_forward.18} parent=47 // pred_check_branch
        %484 = sbr.rel (%p482) target = $region52
      $region51: #{gpt_forward.18} parent=47 // pred_region
        %s485 = sld [smem:[#allocation6 + %s28]]
        %p486 = scmp.lt.s32.totalorder %s26, 1
        %s487 = scalar_select %p486, %s26, 1
        %p488 = scmp.lt.s32.totalorder %s27, 3
        %s489 = scalar_select %p488, %s27, 3
        %p490 = scmp.lt.s32.totalorder %s485, 0
        %s491 = scalar_select %p490, %s485, 0
        %s492 = sadd.s32 %s491, %s489
        %s493 = smul.addr %s487, 4
        %s494 = sadd.s32 %s492, %s493
        %s495 = smul.addr %s494, 4
        %s496 = scalar_lea.vmem %s5, %s495
      $region52: #{gpt_forward.18} parent=47 // pred_fallthru
        _
    $region48: #{gpt_forward.18} parent=5 // pred_fallthru
      _
  $region6: #{gpt_forward.18} parent=0 // loop_footer
    %s17 = sadd.s32 1, %s13
  $region7: #{gpt_forward.18} parent=0 // loop_footer_branch
    %12 = sbr.rel target = $region3
  $region8: #{gpt_forward.18} parent=0 // loop_exit
    _

// kernel: gpt_forward.19
$region0: #{gpt_forward.19}
  #allocation0 [shape = 'u32[]', space=smem, size = 0x4, offset = 0x4, fixed_abs, tag = 'smem constant byte address 0x4 - core index']
  #allocation1 [shape = 'u32[72,128]{1,0:T(1,128)}', space=vmem, size = 0x9000, scoped, tag = 'internal scratch']
  #allocation2 [shape = 'f32[16,32]{1,0:T(8,128)}', space=vmem, size = 0x2000, scoped, tag = 'scratch operand']
  %s0 = inlined_call_operand.vmem [shape: bf16[16,32], index: 0, kind: input, shape index: {}]
  %s1 = inlined_call_operand.vmem [shape: bf16[32,32], index: 1, kind: input, shape index: {}]
  %s2 = inlined_call_operand.vmem [shape: f32[16,32], index: 2, kind: input, shape index: {}]
  %s3 = inlined_call_operand.vmem [shape: f32[16,32], index: 3, kind: output, shape index: {}]
  %s4 = sld [smem:[#allocation0]]
  $region30: #{gpt_forward.19} parent=0
    _
  %s6 = ssub.s32 1, %s4
  %s7 = scalar_select 0, %s6, %s4
  // Predicated region
  $region2: #{gpt_forward.19} parent=0 // pred_check
    _
  $region3: #{gpt_forward.19} parent=0 // pred_check_branch
    %9 = sbr.rel (0) target = $region5
  $region4: #{gpt_forward.19} parent=0 // pred_region
    _
  $region5: #{gpt_forward.19} parent=0 // pred_fallthru
    _
  // Predicated region
  $region6: #{gpt_forward.19} parent=0 // pred_check
    _
  $region7: #{gpt_forward.19} parent=0 // pred_check_branch
    %11 = sbr.rel (0) target = $region9
  $region8: #{gpt_forward.19} parent=0 // pred_region
    _
  $region9: #{gpt_forward.19} parent=0 // pred_fallthru
    _
  // Predicated region
  $region10: #{gpt_forward.19} parent=0 // pred_check
    _
  $region11: #{gpt_forward.19} parent=0 // pred_check_branch
    %13 = sbr.rel (0) target = $region13
  $region12: #{gpt_forward.19} parent=0 // pred_region
    _
  $region13: #{gpt_forward.19} parent=0 // pred_fallthru
    _
  %p15 = scmp.eq.s32.totalorder 0, 0
  // Predicated region
  $region14: #{gpt_forward.19} parent=0 // pred_check
    %p16 = pneg %p15
  $region15: #{gpt_forward.19} parent=0 // pred_check_branch
    %18 = sbr.rel (%p16) target = $region17
  $region16: #{gpt_forward.19} parent=0 // pred_region
    %vm19 = vcmask 261120
    %20 = vst.msk [vmem:[#allocation2] sm:$0xff] %vm19, 0.0
    %21 = vst.msk [vmem:[#allocation2 + $0x8] sm:$0xff] %vm19, 0.0
  $region17: #{gpt_forward.19} parent=0 // pred_fallthru
    _
  %v22 = vld [vmem:[#allocation2] sm:$0xff]
  %v23 = vld [vmem:[#allocation2 + $0x8] sm:$0xff]
  %v24 = vld [vmem:[%s0] sm:$0xf]
  %v25 = vld [vmem:[%s0 + $0x4] sm:$0xf]
  %v26 = vld [vmem:[%s1] sm:$0xf]
  %v27 = vld [vmem:[%s1 + $0x4] sm:$0xf]
  %v28 = vld [vmem:[%s1 + $0x8] sm:$0xf]
  %v29 = vld [vmem:[%s1 + $0xc] sm:$0xf]
  %v32 = vunpack.c.l.b16 %v24
  %v33 = vunpack.c.l.b16 %v25
  %v34 = vpack.c.b16 %v33, %v32
  %v39 = vunpack.c.l.b16 %v26
  %v40 = vunpack.c.l.b16 %v27
  %v41 = vunpack.c.l.b16 %v28
  %v42 = vunpack.c.l.b16 %v29
  %v43 = vpack.c.b16 %v40, %v39
  %v44 = vpack.c.b16 %v42, %v41
  %vm47 = vcmask 261120
  %v49 = vsel %vm47, %v34, 0
  %51 = vmatpush.bf16.msra.mxu0 0
  %52 = vmatpush.bf16.msra.mxu0 0
  %53 = vmatpush.bf16.msra.mxu0 0
  %54 = vmatpush.bf16.msra.mxu0 0
  %55 = vmatpush.bf16.msra.mxu0 0
  %56 = vmatpush.bf16.msra.mxu0 0
  %57 = vmatpush.bf16.msra.mxu0 %v44
  %58 = vmatpush.bf16.msra.mxu0 %v43
  %59 = vmatmul.bf16.gmra.mxu0 %v49
  %v60 = vpop.f32.mrf.mxu0
  %v61 = vadd.f32 0.0, %v60
  %v62 = vpop.f32.mrf.mxu0
  %v63 = vadd.f32 0.0, %v62
  %64 = vdwg.mxu0
  %v65 = vadd.f32 %v22, %v61
  %v66 = vadd.f32 %v23, %v63
  %67 = vst.msk [vmem:[#allocation2] sm:$0xff] %vm47, %v65
  %68 = vst.msk [vmem:[#allocation2 + $0x8] sm:$0xff] %vm47, %v66
  // Predicated region
  $region18: #{gpt_forward.19} parent=0 // pred_check
    %p69 = pneg %p15
  $region19: #{gpt_forward.19} parent=0 // pred_check_branch
    %71 = sbr.rel (%p69) target = $region21
  $region20: #{gpt_forward.19} parent=0 // pred_region
    %v72 = vld [vmem:[#allocation2] sm:$0xff]
    %v73 = vld [vmem:[#allocation2 + $0x8] sm:$0xff]
    %v74 = vld [vmem:[%s2] sm:$0xff]
    %v75 = vld [vmem:[%s2 + $0x8] sm:$0xff]
    %v76 = vadd.f32 %v72, %v74
    %v77 = vadd.f32 %v73, %v75
    %78 = vst.msk [vmem:[%s3] sm:$0xff] %vm47, %v76
    %79 = vst.msk [vmem:[%s3 + $0x8] sm:$0xff] %vm47, %v77
  $region21: #{gpt_forward.19} parent=0 // pred_fallthru
    _
  // Predicated region
  $region22: #{gpt_forward.19} parent=0 // pred_check
    _
  $region23: #{gpt_forward.19} parent=0 // pred_check_branch
    %81 = sbr.rel (0) target = $region25
  $region24: #{gpt_forward.19} parent=0 // pred_region
    _
  $region25: #{gpt_forward.19} parent=0 // pred_fallthru
    _
  // Predicated region
  $region26: #{gpt_forward.19} parent=0 // pred_check
    _
  $region27: #{gpt_forward.19} parent=0 // pred_check_branch
    %83 = sbr.rel (0) target = $region29
  $region28: #{gpt_forward.19} parent=0 // pred_region
    _
  $region29: #{gpt_forward.19} parent=0 // pred_fallthru
    _

// kernel: gpt_forward.21
$region0: #{gpt_forward.21}
  #allocation0 [shape = 'u32[]', space=smem, size = 0x4, offset = 0x4, fixed_abs, tag = 'smem constant byte address 0x4 - core index']
  #allocation1 [shape = 'u32[72,128]{1,0:T(1,128)}', space=vmem, size = 0x9000, scoped, tag = 'internal scratch']
  #allocation2 [shape = 'f32[16,128]{1,0:T(8,128)}', space=vmem, size = 0x2000, scoped, tag = 'scratch operand']
  %s0 = inlined_call_operand.vmem [shape: bf16[16,32], index: 0, kind: input, shape index: {}]
  %s1 = inlined_call_operand.vmem [shape: bf16[32,128], index: 1, kind: input, shape index: {}]
  %s2 = inlined_call_operand.vmem [shape: bf16[16,128], index: 2, kind: output, shape index: {}]
  %s3 = sld [smem:[#allocation0]]
  $region26: #{gpt_forward.21} parent=0
    _
  %s5 = ssub.s32 1, %s3
  %s6 = scalar_select 0, %s5, %s3
  // Predicated region
  $region2: #{gpt_forward.21} parent=0 // pred_check
    _
  $region3: #{gpt_forward.21} parent=0 // pred_check_branch
    %8 = sbr.rel (0) target = $region5
  $region4: #{gpt_forward.21} parent=0 // pred_region
    _
  $region5: #{gpt_forward.21} parent=0 // pred_fallthru
    _
  // Predicated region
  $region6: #{gpt_forward.21} parent=0 // pred_check
    _
  $region7: #{gpt_forward.21} parent=0 // pred_check_branch
    %10 = sbr.rel (0) target = $region9
  $region8: #{gpt_forward.21} parent=0 // pred_region
    _
  $region9: #{gpt_forward.21} parent=0 // pred_fallthru
    _
  %p12 = scmp.eq.s32.totalorder 0, 0
  // Predicated region
  $region10: #{gpt_forward.21} parent=0 // pred_check
    %p13 = pneg %p12
  $region11: #{gpt_forward.21} parent=0 // pred_check_branch
    %15 = sbr.rel (%p13) target = $region13
  $region12: #{gpt_forward.21} parent=0 // pred_region
    %16 = vst [vmem:[#allocation2] sm:$0xff] 0.0
    %17 = vst [vmem:[#allocation2 + $0x8] sm:$0xff] 0.0
  $region13: #{gpt_forward.21} parent=0 // pred_fallthru
    _
  %v18 = vld [vmem:[#allocation2] sm:$0xff]
  %v19 = vld [vmem:[#allocation2 + $0x8] sm:$0xff]
  %v20 = vld [vmem:[%s0] sm:$0xf]
  %v21 = vld [vmem:[%s0 + $0x4] sm:$0xf]
  %v22 = vld [vmem:[%s1] sm:$0xf]
  %v23 = vld [vmem:[%s1 + $0x4] sm:$0xf]
  %v24 = vld [vmem:[%s1 + $0x8] sm:$0xf]
  %v25 = vld [vmem:[%s1 + $0xc] sm:$0xf]
  %v28 = vunpack.c.l.b16 %v20
  %v29 = vunpack.c.l.b16 %v21
  %v30 = vpack.c.b16 %v29, %v28
  %v35 = vunpack.c.l.b16 %v22
  %v36 = vunpack.c.l.b16 %v23
  %v37 = vunpack.c.l.b16 %v24
  %v38 = vunpack.c.l.b16 %v25
  %v39 = vpack.c.b16 %v36, %v35
  %v40 = vpack.c.b16 %v38, %v37
  %vm43 = vcmask 261120
  %v45 = vsel %vm43, %v30, 0
  %47 = vmatpush.bf16.msra.mxu0 0
  %48 = vmatpush.bf16.msra.mxu0 0
  %49 = vmatpush.bf16.msra.mxu0 0
  %50 = vmatpush.bf16.msra.mxu0 0
  %51 = vmatpush.bf16.msra.mxu0 0
  %52 = vmatpush.bf16.msra.mxu0 0
  %53 = vmatpush.bf16.msra.mxu0 %v40
  %54 = vmatpush.bf16.msra.mxu0 %v39
  %55 = vmatmul.bf16.gmra.mxu0 %v45
  %v56 = vpop.f32.mrf.mxu0
  %v57 = vadd.f32 0.0, %v56
  %v58 = vpop.f32.mrf.mxu0
  %v59 = vadd.f32 0.0, %v58
  %60 = vdwg.mxu0
  %v61 = vadd.f32 %v18, %v57
  %v62 = vadd.f32 %v19, %v59
  %63 = vst [vmem:[#allocation2] sm:$0xff] %v61
  %64 = vst [vmem:[#allocation2 + $0x8] sm:$0xff] %v62
  // Predicated region
  $region14: #{gpt_forward.21} parent=0 // pred_check
    %p65 = pneg %p12
  $region15: #{gpt_forward.21} parent=0 // pred_check_branch
    %67 = sbr.rel (%p65) target = $region17
  $region16: #{gpt_forward.21} parent=0 // pred_region
    %v68 = vld [vmem:[#allocation2] sm:$0xff]
    %v69 = vld [vmem:[#allocation2 + $0x8] sm:$0xff]
    %v70 = vmul.f32 %v68, 0.5
    %v71 = vmul.f32 %v69, 0.5
    %v72 = vmul.f32 %v68, 0.70710677
    %v73 = vmul.f32 %v69, 0.70710677
    %vm74 = vcmp.ge.f32.partialorder %v72, 0.0
    %vm75 = vcmp.ge.f32.partialorder %v73, 0.0
    %v76 = vsel %vm74, 1.0, -1.0
    %v77 = vsel %vm75, 1.0, -1.0
    %v78 = vand.u32 2147483647, %v72
    %v79 = vand.u32 2147483647, %v73
    %v80 = vmul.f32 %v78, 0.3275911
    %v81 = vmul.f32 %v79, 0.3275911
    %v82 = vadd.f32 %v80, 1.0
    %v83 = vadd.f32 %v81, 1.0
    %v84 = vrcp.pop %v82
    %v85 = vmul.f32 %v82, %v84
    %v86 = vsub.f32 1.0, %v85
    %v87 = vmul.f32 %v84, %v86
    %v88 = vadd.f32 %v84, %v87
    %vm89 = vweird.f32 %v82
    %vm90 = vweird.f32 %v84
    %vm91 = vmor %vm89, %vm90
    %v92 = vsel %vm91, %v84, %v88
    %v93 = vand.u32 2147483647, %v82
    %vm94 = vcmp.eq.f32.partialorder %v93, 8.507059e+37
    %v95 = vand.u32 %v82, 2147483648
    %v96 = vor.u32 1.1754944e-38, %v95
    %v97 = vsel %vm94, %v96, %v92
    %v98 = vmul.f32 1.0, %v97
    %v99 = vrcp.pop %v83
    %v100 = vmul.f32 %v83, %v99
    %v101 = vsub.f32 1.0, %v100
    %v102 = vmul.f32 %v99, %v101
    %v103 = vadd.f32 %v99, %v102
    %vm104 = vweird.f32 %v83
    %vm105 = vweird.f32 %v99
    %vm106 = vmor %vm104, %vm105
    %v107 = vsel %vm106, %v99, %v103
    %v108 = vand.u32 2147483647, %v83
    %vm109 = vcmp.eq.f32.partialorder %v108, 8.507059e+37
    %v110 = vand.u32 %v83, 2147483648
    %v111 = vor.u32 1.1754944e-38, %v110
    %v112 = vsel %vm109, %v111, %v107
    %v113 = vmul.f32 1.0, %v112
    %v114 = vmul.f32 %v98, 1.0614054
    %v115 = vmul.f32 %v113, 1.0614054
    %v116 = vadd.f32 %v114, -1.4531521
    %v117 = vadd.f32 %v115, -1.4531521
    %v118 = vmul.f32 %v116, %v98
    %v119 = vmul.f32 %v117, %v113
    %v120 = vadd.f32 %v118, 1.4214138
    %v121 = vadd.f32 %v119, 1.4214138
    %v122 = vmul.f32 %v120, %v98
    %v123 = vmul.f32 %v121, %v113
    %v124 = vadd.f32 %v122, -0.28449672
    %v125 = vadd.f32 %v123, -0.28449672
    %v126 = vmul.f32 %v124, %v98
    %v127 = vmul.f32 %v125, %v113
    %v128 = vadd.f32 %v126, 0.2548296
    %v129 = vadd.f32 %v127, 0.2548296
    %v130 = vmul.f32 %v128, %v98
    %v131 = vmul.f32 %v129, %v113
    %v132 = vsub.f32 0.0, %v78
    %v133 = vsub.f32 0.0, %v79
    %v134 = vmul.f32 %v132, %v78
    %v135 = vmul.f32 %v133, %v79
    %v136 = vmul.f32 %v134, 1.442695
    %v137 = vpow.pop %v136
    %v138 = vmul.f32 %v135, 1.442695
    %v139 = vpow.pop %v138
    %v140 = vmul.f32 %v130, %v137
    %v141 = vmul.f32 %v131, %v139
    %v142 = vsub.f32 1.0, %v140
    %v143 = vsub.f32 1.0, %v141
    %v144 = vmul.f32 %v76, %v142
    %v145 = vmul.f32 %v77, %v143
    %v146 = vadd.f32 %v144, 1.0
    %v147 = vadd.f32 %v145, 1.0
    %v148 = vmul.f32 %v70, %v146
    %v149 = vmul.f32 %v71, %v147
    %v150 = vpack.c.bf16 %v148, %v148
    %v151 = vpack.c.bf16 %v149, %v149
    %152 = vst [vmem:[%s2] sm:$0xf] %v150
    %153 = vst [vmem:[%s2 + $0x4] sm:$0xf] %v151
  $region17: #{gpt_forward.21} parent=0 // pred_fallthru
    _
  // Predicated region
  $region18: #{gpt_forward.21} parent=0 // pred_check
    _
  $region19: #{gpt_forward.21} parent=0 // pred_check_branch
    %155 = sbr.rel (0) target = $region21
  $region20: #{gpt_forward.21} parent=0 // pred_region
    _
  $region21: #{gpt_forward.21} parent=0 // pred_fallthru
    _
  // Predicated region
  $region22: #{gpt_forward.21} parent=0 // pred_check
    _
  $region23: #{gpt_forward.21} parent=0 // pred_check_branch
    %157 = sbr.rel (0) target = $region25
  $region24: #{gpt_forward.21} parent=0 // pred_region
    _
  $region25: #{gpt_forward.21} parent=0 // pred_fallthru
    _

// kernel: gpt_forward.22
$region0: #{gpt_forward.22}
  #allocation0 [shape = 'u32[]', space=smem, size = 0x4, offset = 0x4, fixed_abs, tag = 'smem constant byte address 0x4 - core index']
  #allocation1 [shape = 'u32[72,128]{1,0:T(1,128)}', space=vmem, size = 0x9000, scoped, tag = 'internal scratch']
  #allocation2 [shape = 'f32[16,32]{1,0:T(8,128)}', space=vmem, size = 0x2000, scoped, tag = 'scratch operand']
  %s0 = inlined_call_operand.vmem [shape: bf16[16,128], index: 0, kind: input, shape index: {}]
  %s1 = inlined_call_operand.vmem [shape: bf16[128,32], index: 1, kind: input, shape index: {}]
  %s2 = inlined_call_operand.vmem [shape: f32[16,32], index: 2, kind: input, shape index: {}]
  %s3 = inlined_call_operand.vmem [shape: f32[16,32], index: 3, kind: output, shape index: {}]
  %s4 = sld [smem:[#allocation0]]
  $region30: #{gpt_forward.22} parent=0
    _
  %s6 = ssub.s32 1, %s4
  %s7 = scalar_select 0, %s6, %s4
  // Predicated region
  $region2: #{gpt_forward.22} parent=0 // pred_check
    _
  $region3: #{gpt_forward.22} parent=0 // pred_check_branch
    %9 = sbr.rel (0) target = $region5
  $region4: #{gpt_forward.22} parent=0 // pred_region
    _
  $region5: #{gpt_forward.22} parent=0 // pred_fallthru
    _
  // Predicated region
  $region6: #{gpt_forward.22} parent=0 // pred_check
    _
  $region7: #{gpt_forward.22} parent=0 // pred_check_branch
    %11 = sbr.rel (0) target = $region9
  $region8: #{gpt_forward.22} parent=0 // pred_region
    _
  $region9: #{gpt_forward.22} parent=0 // pred_fallthru
    _
  // Predicated region
  $region10: #{gpt_forward.22} parent=0 // pred_check
    _
  $region11: #{gpt_forward.22} parent=0 // pred_check_branch
    %13 = sbr.rel (0) target = $region13
  $region12: #{gpt_forward.22} parent=0 // pred_region
    _
  $region13: #{gpt_forward.22} parent=0 // pred_fallthru
    _
  %p14 = scmp.eq.s32.totalorder 0, 0
  // Predicated region
  $region14: #{gpt_forward.22} parent=0 // pred_check
    %p15 = pneg %p14
  $region15: #{gpt_forward.22} parent=0 // pred_check_branch
    %17 = sbr.rel (%p15) target = $region17
  $region16: #{gpt_forward.22} parent=0 // pred_region
    %vm18 = vcmask 261120
    %19 = vst.msk [vmem:[#allocation2] sm:$0xff] %vm18, 0.0
    %20 = vst.msk [vmem:[#allocation2 + $0x8] sm:$0xff] %vm18, 0.0
  $region17: #{gpt_forward.22} parent=0 // pred_fallthru
    _
  %v21 = vld [vmem:[#allocation2] sm:$0xff]
  %v22 = vld [vmem:[#allocation2 + $0x8] sm:$0xff]
  %v23 = vld [vmem:[%s0] sm:$0xf]
  %v24 = vld [vmem:[%s0 + $0x4] sm:$0xf]
  %v25 = vld [vmem:[%s1] sm:$0xf]
  %v26 = vld [vmem:[%s1 + $0x4] sm:$0xf]
  %v27 = vld [vmem:[%s1 + $0x8] sm:$0xf]
  %v28 = vld [vmem:[%s1 + $0xc] sm:$0xf]
  %v29 = vld [vmem:[%s1 + $0x10] sm:$0xf]
  %v30 = vld [vmem:[%s1 + $0x14] sm:$0xf]
  %v31 = vld [vmem:[%s1 + $0x18] sm:$0xf]
  %v32 = vld [vmem:[%s1 + $0x1c] sm:$0xf]
  %v33 = vld [vmem:[%s1 + $0x20] sm:$0xf]
  %v34 = vld [vmem:[%s1 + $0x24] sm:$0xf]
  %v35 = vld [vmem:[%s1 + $0x28] sm:$0xf]
  %v36 = vld [vmem:[%s1 + $0x2c] sm:$0xf]
  %v37 = vld [vmem:[%s1 + $0x30] sm:$0xf]
  %v38 = vld [vmem:[%s1 + $0x34] sm:$0xf]
  %v39 = vld [vmem:[%s1 + $0x38] sm:$0xf]
  %v40 = vld [vmem:[%s1 + $0x3c] sm:$0xf]
  %v43 = vunpack.c.l.b16 %v23
  %v44 = vunpack.c.l.b16 %v24
  %v45 = vpack.c.b16 %v44, %v43
  %v63 = vunpack.c.l.b16 %v25
  %v64 = vunpack.c.l.b16 %v26
  %v65 = vunpack.c.l.b16 %v27
  %v66 = vunpack.c.l.b16 %v28
  %v67 = vunpack.c.l.b16 %v29
  %v68 = vunpack.c.l.b16 %v30
  %v69 = vunpack.c.l.b16 %v31
  %v70 = vunpack.c.l.b16 %v32
  %v71 = vunpack.c.l.b16 %v33
  %v72 = vunpack.c.l.b16 %v34
  %v73 = vunpack.c.l.b16 %v35
  %v74 = vunpack.c.l.b16 %v36
  %v75 = vunpack.c.l.b16 %v37
  %v76 = vunpack.c.l.b16 %v38
  %v77 = vunpack.c.l.b16 %v39
  %v78 = vunpack.c.l.b16 %v40
  %v79 = vpack.c.b16 %v64, %v63
  %v80 = vpack.c.b16 %v66, %v65
  %v81 = vpack.c.b16 %v68, %v67
  %v82 = vpack.c.b16 %v70, %v69
  %v83 = vpack.c.b16 %v72, %v71
  %v84 = vpack.c.b16 %v74, %v73
  %v85 = vpack.c.b16 %v76, %v75
  %v86 = vpack.c.b16 %v78, %v77
  %95 = vmatpush.bf16.msra.mxu0 %v86
  %96 = vmatpush.bf16.msra.mxu0 %v85
  %97 = vmatpush.bf16.msra.mxu0 %v84
  %98 = vmatpush.bf16.msra.mxu0 %v83
  %99 = vmatpush.bf16.msra.mxu0 %v82
  %100 = vmatpush.bf16.msra.mxu0 %v81
  %101 = vmatpush.bf16.msra.mxu0 %v80
  %102 = vmatpush.bf16.msra.mxu0 %v79
  %103 = vmatmul.bf16.gmra.mxu0 %v45
  %v104 = vpop.f32.mrf.mxu0
  %v105 = vadd.f32 0.0, %v104
  %v106 = vpop.f32.mrf.mxu0
  %v107 = vadd.f32 0.0, %v106
  %108 = vdwg.mxu0
  %v109 = vadd.f32 %v21, %v105
  %v110 = vadd.f32 %v22, %v107
  %vm111 = vcmask 261120
  %112 = vst.msk [vmem:[#allocation2] sm:$0xff] %vm111, %v109
  %113 = vst.msk [vmem:[#allocation2 + $0x8] sm:$0xff] %vm111, %v110
  // Predicated region
  $region18: #{gpt_forward.22} parent=0 // pred_check
    %p114 = pneg %p14
  $region19: #{gpt_forward.22} parent=0 // pred_check_branch
    %116 = sbr.rel (%p114) target = $region21
  $region20: #{gpt_forward.22} parent=0 // pred_region
    %v117 = vld [vmem:[#allocation2] sm:$0xff]
    %v118 = vld [vmem:[#allocation2 + $0x8] sm:$0xff]
    %v119 = vld [vmem:[%s2] sm:$0xff]
    %v120 = vld [vmem:[%s2 + $0x8] sm:$0xff]
    %v121 = vadd.f32 %v117, %v119
    %v122 = vadd.f32 %v118, %v120
    %123 = vst.msk [vmem:[%s3] sm:$0xff] %vm111, %v121
    %124 = vst.msk [vmem:[%s3 + $0x8] sm:$0xff] %vm111, %v122
  $region21: #{gpt_forward.22} parent=0 // pred_fallthru
    _
  // Predicated region
  $region22: #{gpt_forward.22} parent=0 // pred_check
    _
  $region23: #{gpt_forward.22} parent=0 // pred_check_branch
    %126 = sbr.rel (0) target = $region25
  $region24: #{gpt_forward.22} parent=0 // pred_region
    _
  $region25: #{gpt_forward.22} parent=0 // pred_fallthru
    _
  // Predicated region
  $region26: #{gpt_forward.22} parent=0 // pred_check
    _
  $region27: #{gpt_forward.22} parent=0 // pred_check_branch
    %128 = sbr.rel (0) target = $region29
  $region28: #{gpt_forward.22} parent=0 // pred_region
    _
  $region29: #{gpt_forward.22} parent=0 // pred_fallthru
    _

// kernel: gpt_forward.31
$region0: #{gpt_forward.31}
  #allocation0 [shape = 'u32[]', space=smem, size = 0x4, offset = 0x4, fixed_abs, tag = 'smem constant byte address 0x4 - core index']
  #allocation1 [shape = 'u32[72,128]{1,0:T(1,128)}', space=vmem, size = 0x9000, scoped, tag = 'internal scratch']
  #allocation2 [shape = 'f32[14,1]{1,0:T(8,128)}', space=vmem, size = 0x2000, scoped, tag = 'scratch operand']
  #allocation3 [shape = 'f32[14,1]{1,0:T(8,128)}', space=vmem, size = 0x2000, scoped, tag = 'scratch operand']
  #allocation4 [shape = 'f32[14,1]{1,0:T(8,128)}', space=vmem, size = 0x2000, scoped, tag = 'scratch operand']
  %s0 = inlined_call_operand.vmem [shape: bf16[14,32], index: 0, kind: input, shape index: {}]
  %s1 = inlined_call_operand.vmem [shape: bf16[32,128], index: 1, kind: input, shape index: {}]
  %s2 = inlined_call_operand.vmem [shape: s32[14,1], index: 2, kind: input, shape index: {}]
  %s3 = inlined_call_operand.vmem [shape: f32[14,128], index: 3, kind: output, shape index: {0}]
  %s4 = inlined_call_operand.vmem [shape: f32[14,1], index: 4, kind: output, shape index: {1}]
  %5 = xla_tuple %s3, %s4
  %s6 = sld [smem:[#allocation0]]
  $region38: #{gpt_forward.31} parent=0
    _
  %s8 = ssub.s32 1, %s6
  %s9 = scalar_select 0, %s8, %s6
  // Predicated region
  $region2: #{gpt_forward.31} parent=0 // pred_check
    _
  $region3: #{gpt_forward.31} parent=0 // pred_check_branch
    %11 = sbr.rel (0) target = $region5
  $region4: #{gpt_forward.31} parent=0 // pred_region
    _
  $region5: #{gpt_forward.31} parent=0 // pred_fallthru
    _
  // Predicated region
  $region6: #{gpt_forward.31} parent=0 // pred_check
    _
  $region7: #{gpt_forward.31} parent=0 // pred_check_branch
    %13 = sbr.rel (0) target = $region9
  $region8: #{gpt_forward.31} parent=0 // pred_region
    _
  $region9: #{gpt_forward.31} parent=0 // pred_fallthru
    _
  // Predicated region
  $region10: #{gpt_forward.31} parent=0 // pred_check
    _
  $region11: #{gpt_forward.31} parent=0 // pred_check_branch
    %15 = sbr.rel (0) target = $region13
  $region12: #{gpt_forward.31} parent=0 // pred_region
    _
  $region13: #{gpt_forward.31} parent=0 // pred_fallthru
    _
  %p17 = scmp.eq.s32.totalorder 0, 0
  // Predicated region
  $region14: #{gpt_forward.31} parent=0 // pred_check
    %p18 = pneg %p17
  $region15: #{gpt_forward.31} parent=0 // pred_check_branch
    %20 = sbr.rel (%p18) target = $region17
  $region16: #{gpt_forward.31} parent=0 // pred_region
    %vm21 = vcmask 7168
    %22 = vst.msk [vmem:[#allocation2] sm:$0xff] %vm21, -1e+30
    %vm23 = vcmask 5120
    %24 = vst.msk [vmem:[#allocation2 + $0x8] sm:$0x3f] %vm23, -1e+30
    %25 = vst.msk [vmem:[#allocation3] sm:$0xff] %vm21, 0.0
    %26 = vst.msk [vmem:[#allocation3 + $0x8] sm:$0x3f] %vm23, 0.0
    %27 = vst.msk [vmem:[#allocation4] sm:$0xff] %vm21, 0.0
    %28 = vst.msk [vmem:[#allocation4 + $0x8] sm:$0x3f] %vm23, 0.0
  $region17: #{gpt_forward.31} parent=0 // pred_fallthru
    _
  %v29 = vld [vmem:[%s0] sm:$0xf]
  %v30 = vld [vmem:[%s0 + $0x4] sm:$0x7]
  %v31 = vld [vmem:[%s1] sm:$0xf]
  %v32 = vld [vmem:[%s1 + $0x4] sm:$0xf]
  %v33 = vld [vmem:[%s1 + $0x8] sm:$0xf]
  %v34 = vld [vmem:[%s1 + $0xc] sm:$0xf]
  %v37 = vunpack.c.l.b16 %v29
  %v38 = vunpack.c.l.b16 %v30
  %v39 = vpack.c.b16 %v38, %v37
  %v44 = vunpack.c.l.b16 %v31
  %v45 = vunpack.c.l.b16 %v32
  %v46 = vunpack.c.l.b16 %v33
  %v47 = vunpack.c.l.b16 %v34
  %v48 = vpack.c.b16 %v45, %v44
  %v49 = vpack.c.b16 %v47, %v46
  %vm52 = vcmask 261120
  %v54 = vsel %vm52, %v39, 0
  %56 = vmatpush.bf16.msra.mxu0 0
  %57 = vmatpush.bf16.msra.mxu0 0
  %58 = vmatpush.bf16.msra.mxu0 0
  %59 = vmatpush.bf16.msra.mxu0 0
  %60 = vmatpush.bf16.msra.mxu0 0
  %61 = vmatpush.bf16.msra.mxu0 0
  %62 = vmatpush.bf16.msra.mxu0 %v49
  %63 = vmatpush.bf16.msra.mxu0 %v48
  %64 = vmatmul.bf16.gmra.mxu0 %v54
  %v65 = vpop.f32.mrf.mxu0
  %v66 = vadd.f32 0.0, %v65
  %v67 = vpop.f32.mrf.mxu0
  %v68 = vadd.f32 0.0, %v67
  %69 = vdwg.mxu0
  %70 = vst [vmem:[%s3] sm:$0xff] %v66
  %71 = vst [vmem:[%s3 + $0x8] sm:$0x3f] %v68
  %s72 = smul.u32 0, 128
  %v73 = vlaneseq
  %v74 = vand.u32 %v73, 127
  %v75 = vstv %s72
  %v76 = vadd.s32 %v75, %v74
  %vm77 = vcmp.lt.s32.totalorder %v76, 64
  %v78 = vsel %vm77, %v66, -1e+30
  %v79 = vsel %vm77, %v68, -1e+30
  %v80 = vld [vmem:[#allocation2] sm:$0xff]
  %v81 = vld [vmem:[#allocation2 + $0x8] sm:$0x3f]
  %82 = vmax.xlane.f32.xlu0 %v78
  %v83 = vpop.xlane.xlu0 %82
  %vm84 = vcmask 1045504
  %v85 = vsel %vm84, %v79, -inf
  %86 = vmax.xlane.f32.xlu0 %v85
  %v87 = vpop.xlane.xlu0 %86
  %v88 = vmax.f32 %v80, %v83
  %v89 = vmax.f32 %v81, %v87
  %91 = vset.pattern.permute.xlu0 0
  %92 = vperm.xlu0 %91, %v88
  %v93 = vpop.permute.xlu0 %92
  %96 = vset.pattern.permute.xlu0 0
  %97 = vperm.xlu0 %96, %v89
  %v98 = vpop.permute.xlu0 %97
  %v100 = vsub.f32 %v66, %v93
  %v101 = vsub.f32 %v68, %v98
  %v102 = vmul.f32 %v100, 1.442695
  %v103 = vpow.pop %v102
  %v104 = vmul.f32 %v101, 1.442695
  %v105 = vpow.pop %v104
  %v106 = vsel %vm77, %v103, 0.0
  %v107 = vsel %vm77, %v105, 0.0
  %v108 = vld [vmem:[#allocation3] sm:$0xff]
  %v109 = vld [vmem:[#allocation3 + $0x8] sm:$0x3f]
  %v110 = vsub.f32 %v80, %v88
  %v111 = vsub.f32 %v81, %v89
  %v112 = vmul.f32 %v110, 1.442695
  %v113 = vpow.pop %v112
  %v114 = vmul.f32 %v111, 1.442695
  %v115 = vpow.pop %v114
  %v116 = vmul.f32 %v108, %v113
  %v117 = vmul.f32 %v109, %v115
  %118 = vadd.xlane.f32.xlu0 %v106
  %v119 = vpop.xlane.xlu0 %118
  %v120 = vsel %vm84, %v107, 0.0
  %121 = vadd.xlane.f32.xlu0 %v120
  %v122 = vpop.xlane.xlu0 %121
  %v123 = vadd.f32 %v116, %v119
  %v124 = vadd.f32 %v117, %v122
  %vm125 = vcmask 7168
  %126 = vst.msk [vmem:[#allocation3] sm:$0xff] %vm125, %v123
  %vm127 = vcmask 5120
  %128 = vst.msk [vmem:[#allocation3 + $0x8] sm:$0x3f] %vm127, %v124
  %129 = vst.msk [vmem:[#allocation2] sm:$0xff] %vm125, %v88
  %130 = vst.msk [vmem:[#allocation2 + $0x8] sm:$0x3f] %vm127, %v89
  %v131 = vld [vmem:[#allocation4] sm:$0xff]
  %v132 = vld [vmem:[#allocation4 + $0x8] sm:$0x3f]
  %v133 = vld [vmem:[%s2] sm:$0xff]
  %v134 = vld [vmem:[%s2 + $0x8] sm:$0x3f]
  %135 = vset.pattern.permute.xlu0 0
  %136 = vperm.xlu0 %135, %v133
  %v137 = vpop.permute.xlu0 %136
  %138 = vset.pattern.permute.xlu0 0
  %139 = vperm.xlu0 %138, %v134
  %v140 = vpop.permute.xlu0 %139
  %vm141 = vcmp.eq.s32.totalorder %v76, %v137
  %vm142 = vcmp.eq.s32.totalorder %v76, %v140
  %v143 = vsel %vm141, %v66, 0.0
  %v144 = vsel %vm142, %v68, 0.0
  %145 = vadd.xlane.f32.xlu0 %v143
  %v146 = vpop.xlane.xlu0 %145
  %v147 = vsel %vm84, %v144, 0.0
  %148 = vadd.xlane.f32.xlu0 %v147
  %v149 = vpop.xlane.xlu0 %148
  %v150 = vadd.f32 %v131, %v146
  %v151 = vadd.f32 %v132, %v149
  %152 = vst.msk [vmem:[#allocation4] sm:$0xff] %vm125, %v150
  %153 = vst.msk [vmem:[#allocation4 + $0x8] sm:$0x3f] %vm127, %v151
  // Predicated region
  $region18: #{gpt_forward.31} parent=0 // pred_check
    %p154 = pneg %p17
  $region19: #{gpt_forward.31} parent=0 // pred_check_branch
    %156 = sbr.rel (%p154) target = $region21
  $region20: #{gpt_forward.31} parent=0 // pred_region
    %v157 = vld [vmem:[#allocation2] sm:$0xff]
    %v158 = vld [vmem:[#allocation2 + $0x8] sm:$0x3f]
    %v159 = vld [vmem:[#allocation3] sm:$0xff]
    %v160 = vld [vmem:[#allocation3 + $0x8] sm:$0x3f]
    %v161 = vlog2.pop %v159
    %v162 = vmul.f32 %v161, 0.6931472
    %v163 = vlog2.pop %v160
    %v164 = vmul.f32 %v163, 0.6931472
    %v165 = vadd.f32 %v157, %v162
    %v166 = vadd.f32 %v158, %v164
    %v167 = vld [vmem:[#allocation4] sm:$0xff]
    %v168 = vld [vmem:[#allocation4 + $0x8] sm:$0x3f]
    %v169 = vsub.f32 %v165, %v167
    %v170 = vsub.f32 %v166, %v168
    %171 = vst.msk [vmem:[%s4] sm:$0xff] %vm125, %v169
    %172 = vst.msk [vmem:[%s4 + $0x8] sm:$0x3f] %vm127, %v170
  $region21: #{gpt_forward.31} parent=0 // pred_fallthru
    _
  // Predicated region
  $region22: #{gpt_forward.31} parent=0 // pred_check
    _
  $region23: #{gpt_forward.31} parent=0 // pred_check_branch
    %174 = sbr.rel (0) target = $region25
  $region24: #{gpt_forward.31} parent=0 // pred_region
    _
  $region25: #{gpt_forward.31} parent=0 // pred_fallthru
    _
  // Predicated region
  $region26: #{gpt_forward.31} parent=0 // pred_check
    _
  $region27: #{gpt_forward.31} parent=0 // pred_check_branch
    %176 = sbr.rel (0) target = $region29
  $region28: #{gpt_forward.31} parent=0 // pred_region
    _
  $region29: #{gpt_forward.31} parent=0 // pred_fallthru
    _
  // Predicated region
  $region30: #{gpt_forward.31} parent=0 // pred_check
    _
  $region31: #{gpt_forward.31} parent=0 // pred_check_branch
    %178 = sbr.rel (0) target = $region33
  $region32: #{gpt_forward.31} parent=0 // pred_region
    _
  $region33: #{gpt_forward.31} parent=0 // pred_fallthru
    _
  // Predicated region
  $region34: #{gpt_forward.31} parent=0 // pred_check
    _
  $region35: #{gpt_forward.31} parent=0 // pred_check_branch
    %180 = sbr.rel (0) target = $region37
  $region36: #{gpt_forward.31} parent=0 // pred_region
    _
  $region37: #{gpt_forward.31} parent=0 // pred_fallthru
    _

</llo_original>
